<compile_context>
chip_gen: v6e
topology: v6e:2x2x1
jax: 0.10.0
libtpu: 0.0.40
codegen_flags: <defaults>
</compile_context>

<pallas_src>
import functools

import jax
import jax.numpy as jnp
from jax import lax
from jax.experimental import pallas as pl
from jax.experimental.pallas import tpu as pltpu


# --------------------------------------------------------------------------- #
# Kernels
# --------------------------------------------------------------------------- #
def _layer1_project_kernel(a_ref, x_ref, w1_ref, b1_ref, w2_ref, z_ref, acc_ref):
    """Z = relu(A_hat @ X @ W1 + b1) @ W2 for one dst-row tile (reduce over k)."""
    k = pl.program_id(1)

    @pl.when(k == 0)
    def _():
        acc_ref[...] = jnp.zeros_like(acc_ref)

    # Aggregate-first for layer 1 (F_in <= H): accumulate A_hat @ X at width F_in.
    acc_ref[...] += jnp.dot(a_ref[...], x_ref[...],
                            preferred_element_type=jnp.float32)

    @pl.when(k == pl.num_programs(1) - 1)
    def _():
        h1 = jnp.dot(acc_ref[...].astype(jnp.bfloat16), w1_ref[...],
                     preferred_element_type=jnp.float32)
        h1 = jnp.maximum(h1 + b1_ref[...], 0.0)
        # TODO(synk): nn.Dropout(0.5) is the identity in eval mode; a training
        # variant would use pltpu.prng_seed / pltpu.prng_random_bits here.
        # Project-before-aggregate for layer 2 (C << H): emit Z = h1 @ W2.
        z_ref[...] = jnp.dot(h1.astype(jnp.bfloat16), w2_ref[...],
                             preferred_element_type=jnp.float32
                             ).astype(z_ref.dtype)


def _layer2_aggregate_kernel(a_ref, z_ref, b2_ref, o_ref, acc_ref):
    """out = A_hat @ Z + b2 for one dst-row tile (reduce over k)."""
    k = pl.program_id(1)

    @pl.when(k == 0)
    def _():
        acc_ref[...] = jnp.zeros_like(acc_ref)

    acc_ref[...] += jnp.dot(a_ref[...], z_ref[...],
                            preferred_element_type=jnp.float32)

    @pl.when(k == pl.num_programs(1) - 1)
    def _():
        o_ref[...] = acc_ref[...] + b2_ref[...]


# --------------------------------------------------------------------------- #
# Wrapper
# --------------------------------------------------------------------------- #
def _round_up(x, m):
    return ((x + m - 1) // m) * m


@functools.partial(jax.jit, static_argnames=("tm", "tk"))
def gcn_forward(adj, x, w1, b1, w2, b2, *, tm=128, tk=128):
    n = adj.shape[0]
    f_in = x.shape[1]
    h = w1.shape[1]
    c = w2.shape[1]

    # Graph-constant preprocessing (once per graph): symmetric normalization.
    in_deg = jnp.maximum(jnp.sum(adj, axis=1, keepdims=True), 1.0)    # dst degrees
    out_deg = jnp.maximum(jnp.sum(adj, axis=0, keepdims=True), 1.0)   # src degrees
    a_hat = adj * lax.rsqrt(in_deg) * lax.rsqrt(out_deg)

    # Padding: rows/cols of A_hat to the tile grid, classifier cols to 128 lanes.
    n_pad = _round_up(_round_up(n, tm), tk)   # tm, tk are powers of two
    c_pad = _round_up(c, 128)

    a_hat_p = jnp.pad(a_hat, ((0, n_pad - n), (0, n_pad - n))).astype(jnp.bfloat16)
    x_p = jnp.pad(x, ((0, n_pad - n), (0, 0))).astype(jnp.bfloat16)
    w1_b = w1.astype(jnp.bfloat16)
    b1_f = b1.reshape(1, h).astype(jnp.float32)
    w2_p = jnp.pad(w2, ((0, 0), (0, c_pad - c))).astype(jnp.bfloat16)
    b2_p = jnp.pad(b2.reshape(1, c), ((0, 0), (0, c_pad - c))).astype(jnp.float32)

    grid = (n_pad // tm, n_pad // tk)
    mosaic = pltpu.CompilerParams(dimension_semantics=("parallel", "arbitrary"))

    # Kernel 1: Z = relu(A_hat @ X @ W1 + b1) @ W2   (bf16 output, lane-dense)
    z = pl.pallas_call(
        _layer1_project_kernel,
        out_shape=jax.ShapeDtypeStruct((n_pad, c_pad), jnp.bfloat16),
        grid_spec=pltpu.PrefetchScalarGridSpec(
            num_scalar_prefetch=0,
            grid=grid,
            in_specs=[
                pl.BlockSpec((tm, tk), lambda i, k: (i, k)),      # A_hat tile
                pl.BlockSpec((tk, f_in), lambda i, k: (k, 0)),    # X src tile
                pl.BlockSpec((f_in, h), lambda i, k: (0, 0)),     # W1 (resident)
                pl.BlockSpec((1, h), lambda i, k: (0, 0)),        # b1
                pl.BlockSpec((h, c_pad), lambda i, k: (0, 0)),    # W2 (padded)
            ],
            out_specs=pl.BlockSpec((tm, c_pad), lambda i, k: (i, 0)),
            scratch_shapes=[pltpu.VMEM((tm, f_in), jnp.float32)],
        ),
        compiler_params=mosaic,
    )(a_hat_p, x_p, w1_b, b1_f, w2_p)

    # Kernel 2: out = A_hat @ Z + b2
    out = pl.pallas_call(
        _layer2_aggregate_kernel,
        out_shape=jax.ShapeDtypeStruct((n_pad, c_pad), jnp.float32),
        grid_spec=pltpu.PrefetchScalarGridSpec(
            num_scalar_prefetch=0,
            grid=grid,
            in_specs=[
                pl.BlockSpec((tm, tk), lambda i, k: (i, k)),      # A_hat tile
                pl.BlockSpec((tk, c_pad), lambda i, k: (k, 0)),   # Z src tile
                pl.BlockSpec((1, c_pad), lambda i, k: (0, 0)),    # b2 (padded)
            ],
            out_specs=pl.BlockSpec((tm, c_pad), lambda i, k: (i, 0)),
            scratch_shapes=[pltpu.VMEM((tm, c_pad), jnp.float32)],
        ),
        compiler_params=mosaic,
    )(a_hat_p, z, b2_p)

    return out[:n, :c]


# --------------------------------------------------------------------------- #
# References
# --------------------------------------------------------------------------- #
def gcn_reference_f32(adj, x, w1, b1, w2, b2):
    in_deg = jnp.maximum(adj.sum(1, keepdims=True), 1.0)
    out_deg = jnp.maximum(adj.sum(0, keepdims=True), 1.0)
    a_hat = adj * lax.rsqrt(in_deg) * lax.rsqrt(out_deg)
    h1 = jnp.maximum(a_hat @ x @ w1 + b1, 0.0)
    return a_hat @ h1 @ w2 + b2


def gcn_reference_mixed(adj, x, w1, b1, w2, b2):
    """Same math with the kernel's bf16-operand / f32-accumulate strategy."""
    in_deg = jnp.maximum(adj.sum(1, keepdims=True), 1.0)
    out_deg = jnp.maximum(adj.sum(0, keepdims=True), 1.0)
    a_hat = (adj * lax.rsqrt(in_deg) * lax.rsqrt(out_deg)).astype(jnp.bfloat16)
    xb, w1b, w2b = (t.astype(jnp.bfloat16) for t in (x, w1, w2))
    agg1 = jnp.dot(a_hat, xb, preferred_element_type=jnp.float32)
    h1 = jnp.dot(agg1.astype(jnp.bfloat16), w1b, preferred_element_type=jnp.float32)
    h1 = jnp.maximum(h1 + b1, 0.0)
    z = jnp.dot(h1.astype(jnp.bfloat16), w2b,
                preferred_element_type=jnp.float32).astype(jnp.bfloat16)
    return jnp.dot(a_hat, z, preferred_element_type=jnp.float32) + b2


# --------------------------------------------------------------------------- #
# Demo / test
# --------------------------------------------------------------------------- #
if __name__ == "__main__":
    key = jax.random.PRNGKey(0)
    k_adj, k_x, k_w1, k_w2 = jax.random.split(key, 4)

    # Small synthetic problem: 200 nodes (exercises padding + the 2x2 tile grid),
    # in_size=16, h_feats=32, num_classes=4.
    N, F_IN, H_FEATS, N_CLASSES = 200, 16, 32, 4

    # Random undirected graph with self-loops (symmetric dense adjacency).
    upper = (jax.random.uniform(k_adj, (N, N)) < 0.05).astype(jnp.float32)
    adj = jnp.clip(upper + upper.T + jnp.eye(N, dtype=jnp.float32), 0.0, 1.0)

    x = jax.random.normal(k_x, (N, F_IN), dtype=jnp.float32)

    def glorot(k, shape):
        lim = (6.0 / (shape[0] + shape[1])) ** 0.5
        return jax.random.uniform(k, shape, jnp.float32, -lim, lim)

    w1 = glorot(k_w1, (F_IN, H_FEATS))
    b1 = jnp.zeros((1, H_FEATS), dtype=jnp.float32)
    w2 = glorot(k_w2, (H_FEATS, N_CLASSES))
    b2 = jnp.zeros((1, N_CLASSES), dtype=jnp.float32)

    out = gcn_forward(adj, x, w1, b1, w2, b2)
    jax.block_until_ready(out)
    assert out.shape == (N, N_CLASSES)

    ref_mixed = gcn_reference_mixed(adj, x, w1, b1, w2, b2)
    ref_f32 = gcn_reference_f32(adj, x, w1, b1, w2, b2)
    assert jnp.allclose(out, ref_mixed, atol=2e-2, rtol=2e-2), "mismatch vs bf16 ref"
    assert jnp.allclose(out, ref_f32, atol=5e-2, rtol=5e-2), "mismatch vs f32 ref"

    print("KERNEL_OK")
</pallas_src>

<mosaic_0001>
module attributes {stable_mosaic.version = 11 : i64} {
  func.func @_layer1_project_kernel(%arg0: i32, %arg1: i32, %arg2: memref<128x128xbf16, #tpu.memory_space<vmem>>, %arg3: memref<128x16xbf16, #tpu.memory_space<vmem>>, %arg4: memref<16x32xbf16, #tpu.memory_space<vmem>>, %arg5: memref<1x32xf32, #tpu.memory_space<vmem>>, %arg6: memref<32x128xbf16, #tpu.memory_space<vmem>>, %arg7: memref<128x128xbf16, #tpu.memory_space<vmem>>, %arg8: memref<128x16xf32, #tpu.memory_space<vmem>>) attributes {dimension_semantics = [#tpu.dimension_semantics<parallel>, #tpu.dimension_semantics<arbitrary>], iteration_bounds = array<i64: 2, 2>, scalar_prefetch = 0 : i64, scratch_operands = 1 : i64, tpu.core_type = #tpu.core_type<tc>, window_params = [{transform_indices = @transform_0, window_bounds = array<i64: 128, 128>}, {transform_indices = @transform_1, window_bounds = array<i64: 128, 16>}, {pipeline_mode = #tpu.pipeline_mode<synchronous>, transform_indices = @transform_2, window_bounds = array<i64: 16, 32>}, {pipeline_mode = #tpu.pipeline_mode<synchronous>, transform_indices = @transform_3, window_bounds = array<i64: 1, 32>}, {pipeline_mode = #tpu.pipeline_mode<synchronous>, transform_indices = @transform_4, window_bounds = array<i64: 32, 128>}, {transform_indices = @transform_5, window_bounds = array<i64: 128, 128>}]} {
    %c0_i32 = arith.constant 0 : i32
    %0 = arith.cmpi eq, %arg1, %c0_i32 : i32
    %1 = arith.extui %0 : i1 to i32
    %c0_i32_0 = arith.constant 0 : i32
    %2 = arith.cmpi ne, %1, %c0_i32_0 : i32
    scf.if %2 {
      %cst_9 = arith.constant 0.000000e+00 : f32
      %12 = vector.broadcast %cst_9 : f32 to vector<128x16xf32>
      %c0_10 = arith.constant 0 : index
      %c0_11 = arith.constant 0 : index
      %13 = vector.load %arg8[%c0_10, %c0_11] : memref<128x16xf32, #tpu.memory_space<vmem>>, vector<128x16xf32>
      tpu.vector_store %arg8[%c0_10, %c0_11], %12 {strides = array<i32>} : memref<128x16xf32, #tpu.memory_space<vmem>>, vector<128x16xf32>,
    } else {
    }
    %c0 = arith.constant 0 : index
    %c0_1 = arith.constant 0 : index
    %3 = vector.load %arg8[%c0, %c0_1] : memref<128x16xf32, #tpu.memory_space<vmem>>, vector<128x16xf32>
    %c0_2 = arith.constant 0 : index
    %c0_3 = arith.constant 0 : index
    %4 = vector.load %arg2[%c0_2, %c0_3] : memref<128x128xbf16, #tpu.memory_space<vmem>>, vector<128x128xbf16>
    %c0_4 = arith.constant 0 : index
    %c0_5 = arith.constant 0 : index
    %5 = vector.load %arg3[%c0_4, %c0_5] : memref<128x16xbf16, #tpu.memory_space<vmem>>, vector<128x16xbf16>
    %cst = arith.constant dense<0.000000e+00> : vector<128x16xf32>
    %6 = tpu.matmul %4, %5, %cst {dimension_numbers = #tpu.dot_dimension_numbers<[1], [0], [0], [1], [0, 0, 1, 1], [], []>} : vector<128x128xbf16>, vector<128x16xbf16>, vector<128x16xf32> -> vector<128x16xf32>
    %7 = arith.addf %3, %6 : vector<128x16xf32>
    %c0_6 = arith.constant 0 : index
    %c0_7 = arith.constant 0 : index
    %8 = vector.load %arg8[%c0_6, %c0_7] : memref<128x16xf32, #tpu.memory_space<vmem>>, vector<128x16xf32>
    tpu.vector_store %arg8[%c0_6, %c0_7], %7 {strides = array<i32>} : memref<128x16xf32, #tpu.memory_space<vmem>>, vector<128x16xf32>,
    %c1_i32 = arith.constant 1 : i32
    %9 = arith.cmpi eq, %arg1, %c1_i32 : i32
    %10 = arith.extui %9 : i1 to i32
    %c0_i32_8 = arith.constant 0 : i32
    %11 = arith.cmpi ne, %10, %c0_i32_8 : i32
    scf.if %11 {
      %c0_9 = arith.constant 0 : index
      %c0_10 = arith.constant 0 : index
      %12 = vector.load %arg8[%c0_9, %c0_10] : memref<128x16xf32, #tpu.memory_space<vmem>>, vector<128x16xf32>
      %13 = arith.truncf %12 : vector<128x16xf32> to vector<128x16xbf16>
      %c0_11 = arith.constant 0 : index
      %c0_12 = arith.constant 0 : index
      %14 = vector.load %arg4[%c0_11, %c0_12] : memref<16x32xbf16, #tpu.memory_space<vmem>>, vector<16x32xbf16>
      %cst_13 = arith.constant dense<0.000000e+00> : vector<128x32xf32>
      %15 = tpu.matmul %13, %14, %cst_13 {dimension_numbers = #tpu.dot_dimension_numbers<[1], [0], [0], [1], [0, 0, 1, 1], [], []>} : vector<128x16xbf16>, vector<16x32xbf16>, vector<128x32xf32> -> vector<128x32xf32>
      %c0_14 = arith.constant 0 : index
      %c0_15 = arith.constant 0 : index
      %16 = vector.load %arg5[%c0_14, %c0_15] : memref<1x32xf32, #tpu.memory_space<vmem>>, vector<1x32xf32>
      %17 = vector.broadcast %16 : vector<1x32xf32> to vector<128x32xf32>
      %18 = arith.addf %15, %17 : vector<128x32xf32>
      %cst_16 = arith.constant 0.000000e+00 : f32
      %19 = vector.broadcast %cst_16 : f32 to vector<128x32xf32>
      %20 = arith.maximumf %18, %19 : vector<128x32xf32>
      %21 = arith.truncf %20 : vector<128x32xf32> to vector<128x32xbf16>
      %c0_17 = arith.constant 0 : index
      %c0_18 = arith.constant 0 : index
      %22 = vector.load %arg6[%c0_17, %c0_18] : memref<32x128xbf16, #tpu.memory_space<vmem>>, vector<32x128xbf16>
      %cst_19 = arith.constant dense<0.000000e+00> : vector<128x128xf32>
      %23 = tpu.matmul %21, %22, %cst_19 {dimension_numbers = #tpu.dot_dimension_numbers<[1], [0], [0], [1], [0, 0, 1, 1], [], []>} : vector<128x32xbf16>, vector<32x128xbf16>, vector<128x128xf32> -> vector<128x128xf32>
      %24 = arith.truncf %23 : vector<128x128xf32> to vector<128x128xbf16>
      %c0_20 = arith.constant 0 : index
      %c0_21 = arith.constant 0 : index
      %25 = vector.load %arg7[%c0_20, %c0_21] : memref<128x128xbf16, #tpu.memory_space<vmem>>, vector<128x128xbf16>
      tpu.vector_store %arg7[%c0_20, %c0_21], %24 {strides = array<i32>} : memref<128x128xbf16, #tpu.memory_space<vmem>>, vector<128x128xbf16>,
    } else {
    }
    return
  }
  func.func @transform_0(%arg0: i32, %arg1: i32) -> (i32, i32) {
    %c0_i32 = arith.constant 0 : i32
    return %arg0, %arg1 : i32, i32
  }
  func.func @transform_1(%arg0: i32, %arg1: i32) -> (i32, i32) {
    %c0_i32 = arith.constant 0 : i32
    %c0_i32_0 = arith.constant 0 : i32
    return %arg1, %c0_i32 : i32, i32
  }
  func.func @transform_2(%arg0: i32, %arg1: i32) -> (i32, i32) {
    %c0_i32 = arith.constant 0 : i32
    %c0_i32_0 = arith.constant 0 : i32
    %c0_i32_1 = arith.constant 0 : i32
    return %c0_i32, %c0_i32_0 : i32, i32
  }
  func.func @transform_3(%arg0: i32, %arg1: i32) -> (i32, i32) {
    %c0_i32 = arith.constant 0 : i32
    %c0_i32_0 = arith.constant 0 : i32
    %c0_i32_1 = arith.constant 0 : i32
    return %c0_i32, %c0_i32_0 : i32, i32
  }
  func.func @transform_4(%arg0: i32, %arg1: i32) -> (i32, i32) {
    %c0_i32 = arith.constant 0 : i32
    %c0_i32_0 = arith.constant 0 : i32
    %c0_i32_1 = arith.constant 0 : i32
    return %c0_i32, %c0_i32_0 : i32, i32
  }
  func.func @transform_5(%arg0: i32, %arg1: i32) -> (i32, i32) {
    %c0_i32 = arith.constant 0 : i32
    %c0_i32_0 = arith.constant 0 : i32
    return %arg0, %c0_i32 : i32, i32
  }
}

module attributes {stable_mosaic.version = 11 : i64} {
  func.func @_layer2_aggregate_kernel(%arg0: i32, %arg1: i32, %arg2: memref<128x128xbf16, #tpu.memory_space<vmem>>, %arg3: memref<128x128xbf16, #tpu.memory_space<vmem>>, %arg4: memref<1x128xf32, #tpu.memory_space<vmem>>, %arg5: memref<128x128xf32, #tpu.memory_space<vmem>>, %arg6: memref<128x128xf32, #tpu.memory_space<vmem>>) attributes {dimension_semantics = [#tpu.dimension_semantics<parallel>, #tpu.dimension_semantics<arbitrary>], iteration_bounds = array<i64: 2, 2>, scalar_prefetch = 0 : i64, scratch_operands = 1 : i64, tpu.core_type = #tpu.core_type<tc>, window_params = [{transform_indices = @transform_0, window_bounds = array<i64: 128, 128>}, {transform_indices = @transform_1, window_bounds = array<i64: 128, 128>}, {pipeline_mode = #tpu.pipeline_mode<synchronous>, transform_indices = @transform_2, window_bounds = array<i64: 1, 128>}, {transform_indices = @transform_3, window_bounds = array<i64: 128, 128>}]} {
    %c0_i32 = arith.constant 0 : i32
    %0 = arith.cmpi eq, %arg1, %c0_i32 : i32
    %1 = arith.extui %0 : i1 to i32
    %c0_i32_0 = arith.constant 0 : i32
    %2 = arith.cmpi ne, %1, %c0_i32_0 : i32
    scf.if %2 {
      %cst_9 = arith.constant 0.000000e+00 : f32
      %12 = vector.broadcast %cst_9 : f32 to vector<128x128xf32>
      %c0_10 = arith.constant 0 : index
      %c0_11 = arith.constant 0 : index
      %13 = vector.load %arg6[%c0_10, %c0_11] : memref<128x128xf32, #tpu.memory_space<vmem>>, vector<128x128xf32>
      tpu.vector_store %arg6[%c0_10, %c0_11], %12 {strides = array<i32>} : memref<128x128xf32, #tpu.memory_space<vmem>>, vector<128x128xf32>,
    } else {
    }
    %c0 = arith.constant 0 : index
    %c0_1 = arith.constant 0 : index
    %3 = vector.load %arg6[%c0, %c0_1] : memref<128x128xf32, #tpu.memory_space<vmem>>, vector<128x128xf32>
    %c0_2 = arith.constant 0 : index
    %c0_3 = arith.constant 0 : index
    %4 = vector.load %arg2[%c0_2, %c0_3] : memref<128x128xbf16, #tpu.memory_space<vmem>>, vector<128x128xbf16>
    %c0_4 = arith.constant 0 : index
    %c0_5 = arith.constant 0 : index
    %5 = vector.load %arg3[%c0_4, %c0_5] : memref<128x128xbf16, #tpu.memory_space<vmem>>, vector<128x128xbf16>
    %cst = arith.constant dense<0.000000e+00> : vector<128x128xf32>
    %6 = tpu.matmul %4, %5, %cst {dimension_numbers = #tpu.dot_dimension_numbers<[1], [0], [0], [1], [0, 0, 1, 1], [], []>} : vector<128x128xbf16>, vector<128x128xbf16>, vector<128x128xf32> -> vector<128x128xf32>
    %7 = arith.addf %3, %6 : vector<128x128xf32>
    %c0_6 = arith.constant 0 : index
    %c0_7 = arith.constant 0 : index
    %8 = vector.load %arg6[%c0_6, %c0_7] : memref<128x128xf32, #tpu.memory_space<vmem>>, vector<128x128xf32>
    tpu.vector_store %arg6[%c0_6, %c0_7], %7 {strides = array<i32>} : memref<128x128xf32, #tpu.memory_space<vmem>>, vector<128x128xf32>,
    %c1_i32 = arith.constant 1 : i32
    %9 = arith.cmpi eq, %arg1, %c1_i32 : i32
    %10 = arith.extui %9 : i1 to i32
    %c0_i32_8 = arith.constant 0 : i32
    %11 = arith.cmpi ne, %10, %c0_i32_8 : i32
    scf.if %11 {
      %c0_9 = arith.constant 0 : index
      %c0_10 = arith.constant 0 : index
      %12 = vector.load %arg6[%c0_9, %c0_10] : memref<128x128xf32, #tpu.memory_space<vmem>>, vector<128x128xf32>
      %c0_11 = arith.constant 0 : index
      %c0_12 = arith.constant 0 : index
      %13 = vector.load %arg4[%c0_11, %c0_12] : memref<1x128xf32, #tpu.memory_space<vmem>>, vector<1x128xf32>
      %14 = vector.broadcast %13 : vector<1x128xf32> to vector<128x128xf32>
      %15 = arith.addf %12, %14 : vector<128x128xf32>
      %c0_13 = arith.constant 0 : index
      %c0_14 = arith.constant 0 : index
      %16 = vector.load %arg5[%c0_13, %c0_14] : memref<128x128xf32, #tpu.memory_space<vmem>>, vector<128x128xf32>
      tpu.vector_store %arg5[%c0_13, %c0_14], %15 {strides = array<i32>} : memref<128x128xf32, #tpu.memory_space<vmem>>, vector<128x128xf32>,
    } else {
    }
    return
  }
  func.func @transform_0(%arg0: i32, %arg1: i32) -> (i32, i32) {
    %c0_i32 = arith.constant 0 : i32
    return %arg0, %arg1 : i32, i32
  }
  func.func @transform_1(%arg0: i32, %arg1: i32) -> (i32, i32) {
    %c0_i32 = arith.constant 0 : i32
    %c0_i32_0 = arith.constant 0 : i32
    return %arg1, %c0_i32 : i32, i32
  }
  func.func @transform_2(%arg0: i32, %arg1: i32) -> (i32, i32) {
    %c0_i32 = arith.constant 0 : i32
    %c0_i32_0 = arith.constant 0 : i32
    %c0_i32_1 = arith.constant 0 : i32
    return %c0_i32, %c0_i32_0 : i32, i32
  }
  func.func @transform_3(%arg0: i32, %arg1: i32) -> (i32, i32) {
    %c0_i32 = arith.constant 0 : i32
    %c0_i32_0 = arith.constant 0 : i32
    return %arg0, %c0_i32 : i32, i32
  }
}

</mosaic_0001>

<llo_original>
// kernel: gcn_forward.3
$region0: #{gcn_forward.3}
  #allocation0 [shape = 'u32[]', space=smem, size = 0x4, offset = 0x4, fixed_abs, tag = 'smem constant byte address 0x4 - core index']
  #allocation1 [shape = 'u32[144,128]{1,0:T(1,128)}', space=vmem, size = 0x12000, scoped, tag = 'internal scratch']
  #allocation2 [shape = 'f32[128,128]{1,0:T(8,128)}', space=vmem, size = 0x10000, scoped, tag = 'scratch operand']
  %s0 = inlined_call_operand.vmem [shape: bf16[256,256], index: 0, kind: input, shape index: {}]
  %s1 = inlined_call_operand.vmem [shape: bf16[256,128], index: 1, kind: input, shape index: {}]
  %s2 = inlined_call_operand.vmem [shape: f32[1,128], index: 2, kind: input, shape index: {}]
  %s3 = inlined_call_operand.vmem [shape: f32[256,128], index: 3, kind: output, shape index: {}]
  %s4 = sld [smem:[#allocation0]]
  $region94: #{gcn_forward.3} parent=0
    _
  %s6 = ssub.s32 1, %s4
  %s7 = scalar_select 0, %s6, %s4
  $region1: #{gcn_forward.3} parent=0
    #allocation3 [shape = 'u8[65536]{0}', space=vmem, size = 0x10000, scoped, tag = 'input window, operand 0']
    loop: start=0, step=1, limit=6
    $region2: #{gcn_forward.3} parent=1 // loop_pre_header
      _
    $region3: #{gcn_forward.3} parent=1 // loop_header
      %s9 = sphi 0, %s13
      %p10 = scmp.ge.s32.totalorder %s9, 6
      %s16 = sphi 0, %s28
      %s17 = sphi 0, %s24
      %s18 = sphi 0, %s16
      %s19 = sphi 0, %s17
      %s20 = sphi 0, %s18
      %s21 = sphi 0, %s19
      %s33 = sphi 0, %s35
      %s36 = sphi 0, %s33
      %s37 = sphi 0, %s36
      %s53 = sphi 0, %s37
      %s59 = sphi 0, %s61
      %s62 = sphi 0, %s59
      %s63 = sphi 0, %s62
      %s79 = sphi 0, %s63
      %s83 = sphi 0, %s83
      %s85 = sphi 0, %s83
      %s86 = sphi 0, %s85
      %s100 = sphi 0, %s86
      %s106 = sphi 0, %s108
      %s109 = sphi 0, %s106
      %s110 = sphi 0, %s109
      %s126 = sphi 0, %s110
    $region4: #{gcn_forward.3} parent=1 // loop_header_branch
      %12 = sbr.rel (%p10) target = $region8
    $region5: #{gcn_forward.3} parent=1 // loop_body
      %s14 = ssub.s32 %s9, 1
      %s15 = ssub.s32 %s9, 2
      %s22 = sadd.s32 1, %s17
      %p23 = scmp.ge.s32.totalorder %s22, 2
      %s24 = scalar_select %p23, 0, %s22
      %s25 = sadd.s32 1, %s16
      %s26 = scalar_select %p23, %s25, %s16
      %p27 = scmp.ge.s32.totalorder %s26, 2
      %s28 = scalar_select %p27, 0, %s26
      %s29 = ssub.s32 %s16, %s28
      %s30 = ssub.s32 %s17, %s24
      %s31 = sor.u32 %s29, %s30
      %p32 = scmp.eq.s32.totalorder %s31, 0
      %s34 = sadd.s32 %s33, 1
      %s35 = scalar_select %p32, %s33, %s34
      %p38 = pneg %p32
      %p39 = scmp.eq.s32.totalorder %s9, 3
      %p40 = por %p38, %p39
      %p41 = scmp.ne.s32.totalorder %s33, %s36
      %p42 = scmp.eq.s32.totalorder %s9, 0
      %p43 = por %p41, %p42
      %p44 = scmp.ne.s32.totalorder %s33, %s36
      %p45 = scmp.eq.s32.totalorder %s14, 3
      %p46 = por %p44, %p45
      %p47 = scmp.ne.s32.totalorder %s36, %s37
      %p48 = scmp.eq.s32.totalorder %s14, 0
      %p49 = por %p47, %p48
      %p50 = scmp.ne.s32.totalorder %s36, %s37
      %p51 = scmp.eq.s32.totalorder %s15, 3
      %p52 = por %p50, %p51
      %p54 = scmp.ne.s32.totalorder %s37, %s53
      %p55 = scmp.eq.s32.totalorder %s15, 0
      %p56 = por %p54, %p55
      %s57 = ssub.s32 %s17, %s24
      %p58 = scmp.eq.s32.totalorder %s57, 0
      %s60 = sadd.s32 %s59, 1
      %s61 = scalar_select %p58, %s59, %s60
      %p64 = pneg %p58
      %p65 = scmp.eq.s32.totalorder %s9, 3
      %p66 = por %p64, %p65
      %p67 = scmp.ne.s32.totalorder %s59, %s62
      %p68 = scmp.eq.s32.totalorder %s9, 0
      %p69 = por %p67, %p68
      %p70 = scmp.ne.s32.totalorder %s59, %s62
      %p71 = scmp.eq.s32.totalorder %s14, 3
      %p72 = por %p70, %p71
      %p73 = scmp.ne.s32.totalorder %s62, %s63
      %p74 = scmp.eq.s32.totalorder %s14, 0
      %p75 = por %p73, %p74
      %p76 = scmp.ne.s32.totalorder %s62, %s63
      %p77 = scmp.eq.s32.totalorder %s15, 3
      %p78 = por %p76, %p77
      %p80 = scmp.ne.s32.totalorder %s63, %s79
      %p81 = scmp.eq.s32.totalorder %s15, 0
      %p82 = por %p80, %p81
      %s84 = sadd.s32 %s83, 1
      %p87 = scmp.eq.s32.totalorder %s9, 3
      %p88 = scmp.ne.s32.totalorder %s83, %s85
      %p89 = scmp.eq.s32.totalorder %s9, 0
      %p90 = por %p88, %p89
      %p91 = scmp.ne.s32.totalorder %s83, %s85
      %p92 = scmp.eq.s32.totalorder %s14, 3
      %p93 = por %p91, %p92
      %p94 = scmp.ne.s32.totalorder %s85, %s86
      %p95 = scmp.eq.s32.totalorder %s14, 0
      %p96 = por %p94, %p95
      %p97 = scmp.ne.s32.totalorder %s85, %s86
      %p98 = scmp.eq.s32.totalorder %s15, 3
      %p99 = por %p97, %p98
      %p101 = scmp.ne.s32.totalorder %s86, %s100
      %p102 = scmp.eq.s32.totalorder %s15, 0
      %p103 = por %p101, %p102
      %s104 = ssub.s32 %s16, %s28
      %p105 = scmp.eq.s32.totalorder %s104, 0
      %s107 = sadd.s32 %s106, 1
      %s108 = scalar_select %p105, %s106, %s107
      %p111 = pneg %p105
      %p112 = scmp.eq.s32.totalorder %s9, 3
      %p113 = por %p111, %p112
      %p114 = scmp.ne.s32.totalorder %s106, %s109
      %p115 = scmp.eq.s32.totalorder %s9, 0
      %p116 = por %p114, %p115
      %p117 = scmp.ne.s32.totalorder %s106, %s109
      %p118 = scmp.eq.s32.totalorder %s14, 3
      %p119 = por %p117, %p118
      %p120 = scmp.ne.s32.totalorder %s109, %s110
      %p121 = scmp.eq.s32.totalorder %s14, 0
      %p122 = por %p120, %p121
      %p123 = scmp.ne.s32.totalorder %s109, %s110
      %p124 = scmp.eq.s32.totalorder %s15, 3
      %p125 = por %p123, %p124
      %p127 = scmp.ne.s32.totalorder %s110, %s126
      %p128 = scmp.eq.s32.totalorder %s15, 0
      %p129 = por %p127, %p128
      %p130 = scmp.le.s32.totalorder 1, %s9
      %p131 = scmp.lt.s32.totalorder %s9, 5
      %p132 = pnand %p130, %p131
      %p133 = pneg %p132
      // Predicated region
      $region9: #{gcn_forward.3} parent=5 // pred_check
        _
      $region10: #{gcn_forward.3} parent=5 // pred_check_branch
        %135 = sbr.rel (%p132) target = $region12
      $region11: #{gcn_forward.3} parent=5 // pred_region
        %s136 = ssub.s32 %s9, 1
        // Predicated region
        $region13: #{gcn_forward.3} parent=11 // pred_check
          %p137 = pneg %p96
        $region14: #{gcn_forward.3} parent=11 // pred_check_branch
          %139 = sbr.rel (%p137) target = $region16
        $region15: #{gcn_forward.3} parent=11 // pred_region
          _
        $region16: #{gcn_forward.3} parent=11 // pred_fallthru
          _
      $region12: #{gcn_forward.3} parent=5 // pred_fallthru
        _
      %p140 = scmp.lt.s32.totalorder %s9, 4
      // Predicated region
      $region17: #{gcn_forward.3} parent=5 // pred_check
        %p141 = pneg %p140
      $region18: #{gcn_forward.3} parent=5 // pred_check_branch
        %143 = sbr.rel (%p141) target = $region20
      $region19: #{gcn_forward.3} parent=5 // pred_region
        // Predicated region
        $region21: #{gcn_forward.3} parent=19 // pred_check
          %p144 = pneg %p43
        $region22: #{gcn_forward.3} parent=19 // pred_check_branch
          %146 = sbr.rel (%p144) target = $region24
        $region23: #{gcn_forward.3} parent=19 // pred_region
          %s147 = sand.u32 %s33, 1
          %s148 = sand.u32 %s33, 1
          %s149 = smul.addr %s148, 64
          %s150 = scalar_lea.vmem [#allocation3], %s149
          %s151 = smul.u32 16, %s16
          %s152 = smul.addr %s151, 2
          %s153 = sadd.s32 %s17, %s152
          %s154 = smul.addr %s153, 4
          %s155 = scalar_lea.vmem %s0, %s154
          // Predicated region
          $region25: #{gcn_forward.3} parent=23 // pred_check
            _
          $region26: #{gcn_forward.3} parent=23 // pred_check_branch
            %157 = sbr.rel (0) target = $region28
          $region27: #{gcn_forward.3} parent=23 // pred_region
            // Predicated region
            $region29: #{gcn_forward.3} parent=27 // pred_check
              _
            $region30: #{gcn_forward.3} parent=27 // pred_check_branch
              %159 = sbr.rel target = $region32
            $region31: #{gcn_forward.3} parent=27 // pred_region
              // Predicated region
              $region44: #{gcn_forward.3} parent=31 // pred_check
                _
              $region45: #{gcn_forward.3} parent=31 // pred_check_branch
                %205 = sbr.rel (0) target = $region47
              $region46: #{gcn_forward.3} parent=31 // pred_region
                loop: start=0, step=1, limit=1
                $region48: #{gcn_forward.3} parent=46 // loop_pre_header
                  _
                $region49: #{gcn_forward.3} parent=46 // loop_header
                  %s207 = sphi 0, %s211
                  %p208 = scmp.ge.s32.totalorder %s207, 1
                  %s212 = sphi %s155, %s155
                  %s213 = sphi %s150, %s150
                $region50: #{gcn_forward.3} parent=46 // loop_header_branch
                  %210 = sbr.rel (%p208) target = $region54
                $region51: #{gcn_forward.3} parent=46 // loop_body
                  _
                $region52: #{gcn_forward.3} parent=46 // loop_footer
                  %s211 = sadd.s32 1, %s207
                $region53: #{gcn_forward.3} parent=46 // loop_footer_branch
                  %206 = sbr.rel target = $region49
                $region54: #{gcn_forward.3} parent=46 // loop_exit
                  _
                %s215 = ssub.s32 16, 1
                loop: start=0, step=1, limit=1
                $region55: #{gcn_forward.3} parent=46 // loop_pre_header
                  _
                $region56: #{gcn_forward.3} parent=46 // loop_header
                  %s217 = sphi 0, %s221
                  %p218 = scmp.ge.s32.totalorder %s217, 1
                  %s222 = sphi %s155, %s155
                  %s223 = sphi %s150, %s150
                $region57: #{gcn_forward.3} parent=46 // loop_header_branch
                  %220 = sbr.rel (%p218) target = $region61
                $region58: #{gcn_forward.3} parent=46 // loop_body
                  %v224 = vld [vmem:[%s222] sm:%s215]
                  %225 = vst [vmem:[%s223] sm:%s215] %v224
                  %v226 = vld [vmem:[%s222 + $0x8] sm:%s215]
                  %227 = vst [vmem:[%s223 + $0x4] sm:%s215] %v226
                  %v228 = vld [vmem:[%s222 + $0x10] sm:%s215]
                  %229 = vst [vmem:[%s223 + $0x8] sm:%s215] %v228
                  %v230 = vld [vmem:[%s222 + $0x18] sm:%s215]
                  %231 = vst [vmem:[%s223 + $0xc] sm:%s215] %v230
                  %v232 = vld [vmem:[%s222 + $0x20] sm:%s215]
                  %233 = vst [vmem:[%s223 + $0x10] sm:%s215] %v232
                  %v234 = vld [vmem:[%s222 + $0x28] sm:%s215]
                  %235 = vst [vmem:[%s223 + $0x14] sm:%s215] %v234
                  %v236 = vld [vmem:[%s222 + $0x30] sm:%s215]
                  %237 = vst [vmem:[%s223 + $0x18] sm:%s215] %v236
                  %v238 = vld [vmem:[%s222 + $0x38] sm:%s215]
                  %239 = vst [vmem:[%s223 + $0x1c] sm:%s215] %v238
                  %v240 = vld [vmem:[%s222 + $0x40] sm:%s215]
                  %241 = vst [vmem:[%s223 + $0x20] sm:%s215] %v240
                  %v242 = vld [vmem:[%s222 + $0x48] sm:%s215]
                  %243 = vst [vmem:[%s223 + $0x24] sm:%s215] %v242
                  %v244 = vld [vmem:[%s222 + $0x50] sm:%s215]
                  %245 = vst [vmem:[%s223 + $0x28] sm:%s215] %v244
                  %v246 = vld [vmem:[%s222 + $0x58] sm:%s215]
                  %247 = vst [vmem:[%s223 + $0x2c] sm:%s215] %v246
                  %v248 = vld [vmem:[%s222 + $0x60] sm:%s215]
                  %249 = vst [vmem:[%s223 + $0x30] sm:%s215] %v248
                  %v250 = vld [vmem:[%s222 + $0x68] sm:%s215]
                  %251 = vst [vmem:[%s223 + $0x34] sm:%s215] %v250
                  %v252 = vld [vmem:[%s222 + $0x70] sm:%s215]
                  %253 = vst [vmem:[%s223 + $0x38] sm:%s215] %v252
                  %v254 = vld [vmem:[%s222 + $0x78] sm:%s215]
                  %255 = vst [vmem:[%s223 + $0x3c] sm:%s215] %v254
                $region59: #{gcn_forward.3} parent=46 // loop_footer
                  %s221 = sadd.s32 1, %s217
                $region60: #{gcn_forward.3} parent=46 // loop_footer_branch
                  %216 = sbr.rel target = $region56
                $region61: #{gcn_forward.3} parent=46 // loop_exit
                  _
              $region47: #{gcn_forward.3} parent=31 // pred_fallthru
                _
            $region32: #{gcn_forward.3} parent=27 // pred_fallthru
              _
            // Predicated region
            $region33: #{gcn_forward.3} parent=27 // pred_check
              _
            $region34: #{gcn_forward.3} parent=27 // pred_check_branch
              %161 = sbr.rel (0) target = $region36
            $region35: #{gcn_forward.3} parent=27 // pred_region
              %s163 = ssub.s32 16, 1
              loop: start=0, step=1, limit=1
              $region37: #{gcn_forward.3} parent=35 // loop_pre_header
                _
              $region38: #{gcn_forward.3} parent=35 // loop_header
                %s165 = sphi 0, %s169
                %p166 = scmp.ge.s32.totalorder %s165, 1
                %s170 = sphi %s155, %s155
                %s171 = sphi %s150, %s150
              $region39: #{gcn_forward.3} parent=35 // loop_header_branch
                %168 = sbr.rel (%p166) target = $region43
              $region40: #{gcn_forward.3} parent=35 // loop_body
                %v172 = vld [vmem:[%s170] sm:%s163]
                %173 = vst [vmem:[%s171] sm:%s163] %v172
                %v174 = vld [vmem:[%s170 + $0x8] sm:%s163]
                %175 = vst [vmem:[%s171 + $0x4] sm:%s163] %v174
                %v176 = vld [vmem:[%s170 + $0x10] sm:%s163]
                %177 = vst [vmem:[%s171 + $0x8] sm:%s163] %v176
                %v178 = vld [vmem:[%s170 + $0x18] sm:%s163]
                %179 = vst [vmem:[%s171 + $0xc] sm:%s163] %v178
                %v180 = vld [vmem:[%s170 + $0x20] sm:%s163]
                %181 = vst [vmem:[%s171 + $0x10] sm:%s163] %v180
                %v182 = vld [vmem:[%s170 + $0x28] sm:%s163]
                %183 = vst [vmem:[%s171 + $0x14] sm:%s163] %v182
                %v184 = vld [vmem:[%s170 + $0x30] sm:%s163]
                %185 = vst [vmem:[%s171 + $0x18] sm:%s163] %v184
                %v186 = vld [vmem:[%s170 + $0x38] sm:%s163]
                %187 = vst [vmem:[%s171 + $0x1c] sm:%s163] %v186
                %v188 = vld [vmem:[%s170 + $0x40] sm:%s163]
                %189 = vst [vmem:[%s171 + $0x20] sm:%s163] %v188
                %v190 = vld [vmem:[%s170 + $0x48] sm:%s163]
                %191 = vst [vmem:[%s171 + $0x24] sm:%s163] %v190
                %v192 = vld [vmem:[%s170 + $0x50] sm:%s163]
                %193 = vst [vmem:[%s171 + $0x28] sm:%s163] %v192
                %v194 = vld [vmem:[%s170 + $0x58] sm:%s163]
                %195 = vst [vmem:[%s171 + $0x2c] sm:%s163] %v194
                %v196 = vld [vmem:[%s170 + $0x60] sm:%s163]
                %197 = vst [vmem:[%s171 + $0x30] sm:%s163] %v196
                %v198 = vld [vmem:[%s170 + $0x68] sm:%s163]
                %199 = vst [vmem:[%s171 + $0x34] sm:%s163] %v198
                %v200 = vld [vmem:[%s170 + $0x70] sm:%s163]
                %201 = vst [vmem:[%s171 + $0x38] sm:%s163] %v200
                %v202 = vld [vmem:[%s170 + $0x78] sm:%s163]
                %203 = vst [vmem:[%s171 + $0x3c] sm:%s163] %v202
              $region41: #{gcn_forward.3} parent=35 // loop_footer
                %s169 = sadd.s32 1, %s165
              $region42: #{gcn_forward.3} parent=35 // loop_footer_branch
                %164 = sbr.rel target = $region38
              $region43: #{gcn_forward.3} parent=35 // loop_exit
                _
            $region36: #{gcn_forward.3} parent=27 // pred_fallthru
              _
          $region28: #{gcn_forward.3} parent=23 // pred_fallthru
            _
          %256 = vnop
        $region24: #{gcn_forward.3} parent=19 // pred_fallthru
          _
        // Predicated region
        $region62: #{gcn_forward.3} parent=19 // pred_check
          %p257 = pneg %p69
        $region63: #{gcn_forward.3} parent=19 // pred_check_branch
          %259 = sbr.rel (%p257) target = $region65
        $region64: #{gcn_forward.3} parent=19 // pred_region
          %s260 = smul.u32 16, %s17
          %p261 = scmp.lt.s32.totalorder %s260, 31
          %s262 = scalar_select %p261, %s260, 31
          %s263 = smul.addr %s262, 4
          %s264 = scalar_lea.vmem %s1, %s263
          %s265 = smul.u32 16, %s17
        $region65: #{gcn_forward.3} parent=19 // pred_fallthru
          _
      $region20: #{gcn_forward.3} parent=5 // pred_fallthru
        _
      %p266 = scmp.le.s32.totalorder 1, %s9
      %p267 = scmp.lt.s32.totalorder %s9, 5
      %p268 = pnand %p266, %p267
      %p269 = pneg %p268
      // Predicated region
      $region66: #{gcn_forward.3} parent=5 // pred_check
        _
      $region67: #{gcn_forward.3} parent=5 // pred_check_branch
        %271 = sbr.rel (%p268) target = $region69
      $region68: #{gcn_forward.3} parent=5 // pred_region
        %s272 = ssub.s32 %s9, 1
        %s273 = sand.u32 %s36, 1
        %s274 = sand.u32 %s36, 1
        %s275 = smul.addr %s274, 64
        %s276 = scalar_lea.vmem [#allocation3], %s275
        // Predicated region
        $region70: #{gcn_forward.3} parent=68 // pred_check
          %p277 = pneg %p49
        $region71: #{gcn_forward.3} parent=68 // pred_check_branch
          %279 = sbr.rel (%p277) target = $region73
        $region72: #{gcn_forward.3} parent=68 // pred_region
          _
        $region73: #{gcn_forward.3} parent=68 // pred_fallthru
          _
        %s280 = sand.u32 %s36, 1
        %s281 = sand.u32 %s36, 1
        %s282 = smul.addr %s281, 64
        %s283 = scalar_lea.vmem [#allocation3], %s282
        %p284 = pneg %p49
        %p285 = pneg %p46
        %s286 = smul.u32 16, %s19
        %p287 = scmp.lt.s32.totalorder %s286, 31
        %s288 = scalar_select %p287, %s286, 31
        %s289 = smul.addr %s288, 4
        %s290 = scalar_lea.vmem %s1, %s289
        %p291 = pneg %p75
        %p292 = pneg %p72
        %p293 = pneg %p96
        %p294 = pneg %p93
        %p295 = pneg %p122
        %p296 = pneg %p119
        %s297 = smul.u32 16, %s18
        %p298 = scmp.lt.s32.totalorder %s297, 31
        %s299 = scalar_select %p298, %s297, 31
        %s300 = smul.addr %s299, 8
        %s301 = scalar_lea.vmem %s3, %s300
        %s302 = smul.u32 16, %s18
        %s303 = smul.u32 16, %s19
        %p304 = scmp.lt.s32.totalorder %s303, 31
        %s305 = scalar_select %p304, %s303, 31
        %s306 = smul.addr %s305, 4
        %s307 = scalar_lea.vmem %s1, %s306
        %s308 = smul.u32 16, %s19
        %s309 = smul.u32 16, %s18
        %p310 = scmp.lt.s32.totalorder %s309, 31
        %s311 = scalar_select %p310, %s309, 31
        %s312 = smul.addr %s311, 8
        %s313 = scalar_lea.vmem %s3, %s312
        %s314 = smul.u32 16, %s18
        %p316 = scmp.eq.s32.totalorder %s19, 0
        // Predicated region
        $region74: #{gcn_forward.3} parent=68 // pred_check
          %p317 = pneg %p316
        $region75: #{gcn_forward.3} parent=68 // pred_check_branch
          %319 = sbr.rel (%p317) target = $region77
        $region76: #{gcn_forward.3} parent=68 // pred_region
          %320 = vst [vmem:[#allocation2] sm:$0xff] 0.0
          %321 = vst [vmem:[#allocation2 + $0x8] sm:$0xff] 0.0
          %322 = vst [vmem:[#allocation2 + $0x10] sm:$0xff] 0.0
          %323 = vst [vmem:[#allocation2 + $0x18] sm:$0xff] 0.0
          %324 = vst [vmem:[#allocation2 + $0x20] sm:$0xff] 0.0
          %325 = vst [vmem:[#allocation2 + $0x28] sm:$0xff] 0.0
          %326 = vst [vmem:[#allocation2 + $0x30] sm:$0xff] 0.0
          %327 = vst [vmem:[#allocation2 + $0x38] sm:$0xff] 0.0
          %328 = vst [vmem:[#allocation2 + $0x40] sm:$0xff] 0.0
          %329 = vst [vmem:[#allocation2 + $0x48] sm:$0xff] 0.0
          %330 = vst [vmem:[#allocation2 + $0x50] sm:$0xff] 0.0
          %331 = vst [vmem:[#allocation2 + $0x58] sm:$0xff] 0.0
          %332 = vst [vmem:[#allocation2 + $0x60] sm:$0xff] 0.0
          %333 = vst [vmem:[#allocation2 + $0x68] sm:$0xff] 0.0
          %334 = vst [vmem:[#allocation2 + $0x70] sm:$0xff] 0.0
          %335 = vst [vmem:[#allocation2 + $0x78] sm:$0xff] 0.0
        $region77: #{gcn_forward.3} parent=68 // pred_fallthru
          _
        %v336 = vld [vmem:[#allocation2] sm:$0xff]
        %v337 = vld [vmem:[#allocation2 + $0x8] sm:$0xff]
        %v338 = vld [vmem:[#allocation2 + $0x10] sm:$0xff]
        %v339 = vld [vmem:[#allocation2 + $0x18] sm:$0xff]
        %v340 = vld [vmem:[#allocation2 + $0x20] sm:$0xff]
        %v341 = vld [vmem:[#allocation2 + $0x28] sm:$0xff]
        %v342 = vld [vmem:[#allocation2 + $0x30] sm:$0xff]
        %v343 = vld [vmem:[#allocation2 + $0x38] sm:$0xff]
        %v344 = vld [vmem:[#allocation2 + $0x40] sm:$0xff]
        %v345 = vld [vmem:[#allocation2 + $0x48] sm:$0xff]
        %v346 = vld [vmem:[#allocation2 + $0x50] sm:$0xff]
        %v347 = vld [vmem:[#allocation2 + $0x58] sm:$0xff]
        %v348 = vld [vmem:[#allocation2 + $0x60] sm:$0xff]
        %v349 = vld [vmem:[#allocation2 + $0x68] sm:$0xff]
        %v350 = vld [vmem:[#allocation2 + $0x70] sm:$0xff]
        %v351 = vld [vmem:[#allocation2 + $0x78] sm:$0xff]
        %v352 = vld [vmem:[%s276] sm:$0xf]
        %v353 = vld [vmem:[%s276 + $0x4] sm:$0xf]
        %v354 = vld [vmem:[%s276 + $0x8] sm:$0xf]
        %v355 = vld [vmem:[%s276 + $0xc] sm:$0xf]
        %v356 = vld [vmem:[%s276 + $0x10] sm:$0xf]
        %v357 = vld [vmem:[%s276 + $0x14] sm:$0xf]
        %v358 = vld [vmem:[%s276 + $0x18] sm:$0xf]
        %v359 = vld [vmem:[%s276 + $0x1c] sm:$0xf]
        %v360 = vld [vmem:[%s276 + $0x20] sm:$0xf]
        %v361 = vld [vmem:[%s276 + $0x24] sm:$0xf]
        %v362 = vld [vmem:[%s276 + $0x28] sm:$0xf]
        %v363 = vld [vmem:[%s276 + $0x2c] sm:$0xf]
        %v364 = vld [vmem:[%s276 + $0x30] sm:$0xf]
        %v365 = vld [vmem:[%s276 + $0x34] sm:$0xf]
        %v366 = vld [vmem:[%s276 + $0x38] sm:$0xf]
        %v367 = vld [vmem:[%s276 + $0x3c] sm:$0xf]
        %v368 = vld [vmem:[%s307] sm:$0xf]
        %v369 = vld [vmem:[%s307 + $0x4] sm:$0xf]
        %v370 = vld [vmem:[%s307 + $0x8] sm:$0xf]
        %v371 = vld [vmem:[%s307 + $0xc] sm:$0xf]
        %v372 = vld [vmem:[%s307 + $0x10] sm:$0xf]
        %v373 = vld [vmem:[%s307 + $0x14] sm:$0xf]
        %v374 = vld [vmem:[%s307 + $0x18] sm:$0xf]
        %v375 = vld [vmem:[%s307 + $0x1c] sm:$0xf]
        %v376 = vld [vmem:[%s307 + $0x20] sm:$0xf]
        %v377 = vld [vmem:[%s307 + $0x24] sm:$0xf]
        %v378 = vld [vmem:[%s307 + $0x28] sm:$0xf]
        %v379 = vld [vmem:[%s307 + $0x2c] sm:$0xf]
        %v380 = vld [vmem:[%s307 + $0x30] sm:$0xf]
        %v381 = vld [vmem:[%s307 + $0x34] sm:$0xf]
        %v382 = vld [vmem:[%s307 + $0x38] sm:$0xf]
        %v383 = vld [vmem:[%s307 + $0x3c] sm:$0xf]
        %v400 = vunpack.c.l.b16 %v352
        %v401 = vunpack.c.l.b16 %v353
        %v402 = vunpack.c.l.b16 %v354
        %v403 = vunpack.c.l.b16 %v355
        %v404 = vunpack.c.l.b16 %v356
        %v405 = vunpack.c.l.b16 %v357
        %v406 = vunpack.c.l.b16 %v358
        %v407 = vunpack.c.l.b16 %v359
        %v408 = vunpack.c.l.b16 %v360
        %v409 = vunpack.c.l.b16 %v361
        %v410 = vunpack.c.l.b16 %v362
        %v411 = vunpack.c.l.b16 %v363
        %v412 = vunpack.c.l.b16 %v364
        %v413 = vunpack.c.l.b16 %v365
        %v414 = vunpack.c.l.b16 %v366
        %v415 = vunpack.c.l.b16 %v367
        %v416 = vpack.c.b16 %v401, %v400
        %v417 = vpack.c.b16 %v403, %v402
        %v418 = vpack.c.b16 %v405, %v404
        %v419 = vpack.c.b16 %v407, %v406
        %v420 = vpack.c.b16 %v409, %v408
        %v421 = vpack.c.b16 %v411, %v410
        %v422 = vpack.c.b16 %v413, %v412
        %v423 = vpack.c.b16 %v415, %v414
        %v448 = vunpack.c.l.b16 %v368
        %v449 = vunpack.c.l.b16 %v369
        %v450 = vunpack.c.l.b16 %v370
        %v451 = vunpack.c.l.b16 %v371
        %v452 = vunpack.c.l.b16 %v372
        %v453 = vunpack.c.l.b16 %v373
        %v454 = vunpack.c.l.b16 %v374
        %v455 = vunpack.c.l.b16 %v375
        %v456 = vunpack.c.l.b16 %v376
        %v457 = vunpack.c.l.b16 %v377
        %v458 = vunpack.c.l.b16 %v378
        %v459 = vunpack.c.l.b16 %v379
        %v460 = vunpack.c.l.b16 %v380
        %v461 = vunpack.c.l.b16 %v381
        %v462 = vunpack.c.l.b16 %v382
        %v463 = vunpack.c.l.b16 %v383
        %v464 = vpack.c.b16 %v449, %v448
        %v465 = vpack.c.b16 %v451, %v450
        %v466 = vpack.c.b16 %v453, %v452
        %v467 = vpack.c.b16 %v455, %v454
        %v468 = vpack.c.b16 %v457, %v456
        %v469 = vpack.c.b16 %v459, %v458
        %v470 = vpack.c.b16 %v461, %v460
        %v471 = vpack.c.b16 %v463, %v462
        %480 = vmatprep.subr.bf16.mxu0 0
        %481 = vmatpush1.bf16.msra.mxu0 %v471
        %482 = vmatprep.subr.bf16.mxu0 0
        %483 = vmatpush1.bf16.msra.mxu0 %v470
        %484 = vmatprep.subr.bf16.mxu0 0
        %485 = vmatpush1.bf16.msra.mxu0 %v469
        %486 = vmatprep.subr.bf16.mxu0 0
        %487 = vmatpush1.bf16.msra.mxu0 %v468
        %488 = vmatprep.subr.bf16.mxu0 0
        %489 = vmatpush1.bf16.msra.mxu0 %v467
        %490 = vmatprep.subr.bf16.mxu0 0
        %491 = vmatpush1.bf16.msra.mxu0 %v466
        %492 = vmatprep.subr.bf16.mxu0 0
        %493 = vmatpush1.bf16.msra.mxu0 %v465
        %494 = vmatprep.subr.bf16.mxu0 0
        %495 = vmatpush1.bf16.msra.mxu0 %v464
        %496 = vmatprep.subr.bf16.mxu0 0
        %497 = vmatpush2.bf16.msra.mxu0 0
        %498 = vmatprep.subr.bf16.mxu0 0
        %499 = vmatpush2.bf16.msra.mxu0 0
        %500 = vmatprep.subr.bf16.mxu0 0
        %501 = vmatpush2.bf16.msra.mxu0 0
        %502 = vmatprep.subr.bf16.mxu0 0
        %503 = vmatpush2.bf16.msra.mxu0 0
        %504 = vmatprep.subr.bf16.mxu0 0
        %505 = vmatpush2.bf16.msra.mxu0 0
        %506 = vmatprep.subr.bf16.mxu0 0
        %507 = vmatpush2.bf16.msra.mxu0 0
        %508 = vmatprep.subr.bf16.mxu0 0
        %509 = vmatpush2.bf16.msra.mxu0 0
        %510 = vmatprep.subr.bf16.mxu0 0
        %511 = vmatpush2.bf16.msra.mxu0 0
        %512 = vmatprep.mubr.bf16.mxu0 0
        %513 = vmatmul.mubr.bf16.gmra.mxu0 %v416
        %v514 = vpop.f32.mrf.mxu0
        %v515 = vadd.f32 0.0, %v514
        %v516 = vpop.f32.mrf.mxu0
        %v517 = vpop.f32.mrf.mxu0
        %v518 = vadd.f32 0.0, %v517
        %v519 = vpop.f32.mrf.mxu0
        %520 = vmatprep.mubr.bf16.mxu0 0
        %521 = vmatmul.mubr.bf16.gmra.mxu0 %v417
        %v522 = vpop.f32.mrf.mxu0
        %v523 = vadd.f32 0.0, %v522
        %v524 = vpop.f32.mrf.mxu0
        %v525 = vpop.f32.mrf.mxu0
        %v526 = vadd.f32 0.0, %v525
        %v527 = vpop.f32.mrf.mxu0
        %528 = vmatprep.mubr.bf16.mxu0 0
        %529 = vmatmul.mubr.bf16.gmra.mxu0 %v418
        %v530 = vpop.f32.mrf.mxu0
        %v531 = vadd.f32 0.0, %v530
        %v532 = vpop.f32.mrf.mxu0
        %v533 = vpop.f32.mrf.mxu0
        %v534 = vadd.f32 0.0, %v533
        %v535 = vpop.f32.mrf.mxu0
        %536 = vmatprep.mubr.bf16.mxu0 0
        %537 = vmatmul.mubr.bf16.gmra.mxu0 %v419
        %v538 = vpop.f32.mrf.mxu0
        %v539 = vadd.f32 0.0, %v538
        %v540 = vpop.f32.mrf.mxu0
        %v541 = vpop.f32.mrf.mxu0
        %v542 = vadd.f32 0.0, %v541
        %v543 = vpop.f32.mrf.mxu0
        %544 = vmatprep.mubr.bf16.mxu0 0
        %545 = vmatmul.mubr.bf16.gmra.mxu0 %v420
        %v546 = vpop.f32.mrf.mxu0
        %v547 = vadd.f32 0.0, %v546
        %v548 = vpop.f32.mrf.mxu0
        %v549 = vpop.f32.mrf.mxu0
        %v550 = vadd.f32 0.0, %v549
        %v551 = vpop.f32.mrf.mxu0
        %552 = vmatprep.mubr.bf16.mxu0 0
        %553 = vmatmul.mubr.bf16.gmra.mxu0 %v421
        %v554 = vpop.f32.mrf.mxu0
        %v555 = vadd.f32 0.0, %v554
        %v556 = vpop.f32.mrf.mxu0
        %v557 = vpop.f32.mrf.mxu0
        %v558 = vadd.f32 0.0, %v557
        %v559 = vpop.f32.mrf.mxu0
        %560 = vmatprep.mubr.bf16.mxu0 0
        %561 = vmatmul.mubr.bf16.gmra.mxu0 %v422
        %v562 = vpop.f32.mrf.mxu0
        %v563 = vadd.f32 0.0, %v562
        %v564 = vpop.f32.mrf.mxu0
        %v565 = vpop.f32.mrf.mxu0
        %v566 = vadd.f32 0.0, %v565
        %v567 = vpop.f32.mrf.mxu0
        %568 = vmatprep.mubr.bf16.mxu0 0
        %569 = vmatmul.mubr.bf16.gmra.mxu0 %v423
        %v570 = vpop.f32.mrf.mxu0
        %v571 = vadd.f32 0.0, %v570
        %v572 = vpop.f32.mrf.mxu0
        %v573 = vpop.f32.mrf.mxu0
        %v574 = vadd.f32 0.0, %v573
        %v575 = vpop.f32.mrf.mxu0
        %576 = vdwg.mxu0
        %v577 = vadd.f32 %v336, %v515
        %v578 = vadd.f32 %v337, %v518
        %v579 = vadd.f32 %v338, %v523
        %v580 = vadd.f32 %v339, %v526
        %v581 = vadd.f32 %v340, %v531
        %v582 = vadd.f32 %v341, %v534
        %v583 = vadd.f32 %v342, %v539
        %v584 = vadd.f32 %v343, %v542
        %v585 = vadd.f32 %v344, %v547
        %v586 = vadd.f32 %v345, %v550
        %v587 = vadd.f32 %v346, %v555
        %v588 = vadd.f32 %v347, %v558
        %v589 = vadd.f32 %v348, %v563
        %v590 = vadd.f32 %v349, %v566
        %v591 = vadd.f32 %v350, %v571
        %v592 = vadd.f32 %v351, %v574
        %593 = vst [vmem:[#allocation2] sm:$0xff] %v577
        %594 = vst [vmem:[#allocation2 + $0x8] sm:$0xff] %v578
        %595 = vst [vmem:[#allocation2 + $0x10] sm:$0xff] %v579
        %596 = vst [vmem:[#allocation2 + $0x18] sm:$0xff] %v580
        %597 = vst [vmem:[#allocation2 + $0x20] sm:$0xff] %v581
        %598 = vst [vmem:[#allocation2 + $0x28] sm:$0xff] %v582
        %599 = vst [vmem:[#allocation2 + $0x30] sm:$0xff] %v583
        %600 = vst [vmem:[#allocation2 + $0x38] sm:$0xff] %v584
        %601 = vst [vmem:[#allocation2 + $0x40] sm:$0xff] %v585
        %602 = vst [vmem:[#allocation2 + $0x48] sm:$0xff] %v586
        %603 = vst [vmem:[#allocation2 + $0x50] sm:$0xff] %v587
        %604 = vst [vmem:[#allocation2 + $0x58] sm:$0xff] %v588
        %605 = vst [vmem:[#allocation2 + $0x60] sm:$0xff] %v589
        %606 = vst [vmem:[#allocation2 + $0x68] sm:$0xff] %v590
        %607 = vst [vmem:[#allocation2 + $0x70] sm:$0xff] %v591
        %608 = vst [vmem:[#allocation2 + $0x78] sm:$0xff] %v592
        %p609 = scmp.eq.s32.totalorder %s19, 1
        // Predicated region
        $region78: #{gcn_forward.3} parent=68 // pred_check
          %p610 = pneg %p609
        $region79: #{gcn_forward.3} parent=68 // pred_check_branch
          %612 = sbr.rel (%p610) target = $region81
        $region80: #{gcn_forward.3} parent=68 // pred_region
          %v613 = vld [vmem:[#allocation2] sm:$0xff]
          %v614 = vld [vmem:[#allocation2 + $0x8] sm:$0xff]
          %v615 = vld [vmem:[#allocation2 + $0x10] sm:$0xff]
          %v616 = vld [vmem:[#allocation2 + $0x18] sm:$0xff]
          %v617 = vld [vmem:[#allocation2 + $0x20] sm:$0xff]
          %v618 = vld [vmem:[#allocation2 + $0x28] sm:$0xff]
          %v619 = vld [vmem:[#allocation2 + $0x30] sm:$0xff]
          %v620 = vld [vmem:[#allocation2 + $0x38] sm:$0xff]
          %v621 = vld [vmem:[#allocation2 + $0x40] sm:$0xff]
          %v622 = vld [vmem:[#allocation2 + $0x48] sm:$0xff]
          %v623 = vld [vmem:[#allocation2 + $0x50] sm:$0xff]
          %v624 = vld [vmem:[#allocation2 + $0x58] sm:$0xff]
          %v625 = vld [vmem:[#allocation2 + $0x60] sm:$0xff]
          %v626 = vld [vmem:[#allocation2 + $0x68] sm:$0xff]
          %v627 = vld [vmem:[#allocation2 + $0x70] sm:$0xff]
          %v628 = vld [vmem:[#allocation2 + $0x78] sm:$0xff]
          %v629 = vld [vmem:[%s2] sm:$0x1]
          %v631 = vlaneseq
          %v632 = vshrl.u32 %v631, 7
          %v633 = vsub.s32 0, %v632
          %v634 = vrot.slane %v629, %v633
          %v636 = vadd.f32 %v613, %v634
          %v637 = vadd.f32 %v614, %v634
          %v638 = vadd.f32 %v615, %v634
          %v639 = vadd.f32 %v616, %v634
          %v640 = vadd.f32 %v617, %v634
          %v641 = vadd.f32 %v618, %v634
          %v642 = vadd.f32 %v619, %v634
          %v643 = vadd.f32 %v620, %v634
          %v644 = vadd.f32 %v621, %v634
          %v645 = vadd.f32 %v622, %v634
          %v646 = vadd.f32 %v623, %v634
          %v647 = vadd.f32 %v624, %v634
          %v648 = vadd.f32 %v625, %v634
          %v649 = vadd.f32 %v626, %v634
          %v650 = vadd.f32 %v627, %v634
          %v651 = vadd.f32 %v628, %v634
          %652 = vst [vmem:[%s313] sm:$0xff] %v636
          %653 = vst [vmem:[%s313 + $0x8] sm:$0xff] %v637
          %654 = vst [vmem:[%s313 + $0x10] sm:$0xff] %v638
          %655 = vst [vmem:[%s313 + $0x18] sm:$0xff] %v639
          %656 = vst [vmem:[%s313 + $0x20] sm:$0xff] %v640
          %657 = vst [vmem:[%s313 + $0x28] sm:$0xff] %v641
          %658 = vst [vmem:[%s313 + $0x30] sm:$0xff] %v642
          %659 = vst [vmem:[%s313 + $0x38] sm:$0xff] %v643
          %660 = vst [vmem:[%s313 + $0x40] sm:$0xff] %v644
          %661 = vst [vmem:[%s313 + $0x48] sm:$0xff] %v645
          %662 = vst [vmem:[%s313 + $0x50] sm:$0xff] %v646
          %663 = vst [vmem:[%s313 + $0x58] sm:$0xff] %v647
          %664 = vst [vmem:[%s313 + $0x60] sm:$0xff] %v648
          %665 = vst [vmem:[%s313 + $0x68] sm:$0xff] %v649
          %666 = vst [vmem:[%s313 + $0x70] sm:$0xff] %v650
          %667 = vst [vmem:[%s313 + $0x78] sm:$0xff] %v651
        $region81: #{gcn_forward.3} parent=68 // pred_fallthru
          _
        %s668 = smul.u32 16, %s18
        %p669 = scmp.lt.s32.totalorder %s668, 31
        %s670 = scalar_select %p669, %s668, 31
        %s671 = smul.addr %s670, 8
        %s672 = scalar_lea.vmem %s3, %s671
        // Predicated region
        $region82: #{gcn_forward.3} parent=68 // pred_check
          %p673 = pneg %p119
        $region83: #{gcn_forward.3} parent=68 // pred_check_branch
          %675 = sbr.rel (%p673) target = $region85
        $region84: #{gcn_forward.3} parent=68 // pred_region
          %s676 = smul.u32 16, %s18
        $region85: #{gcn_forward.3} parent=68 // pred_fallthru
          _
      $region69: #{gcn_forward.3} parent=5 // pred_fallthru
        _
      %p677 = scmp.le.s32.totalorder 2, %s9
      // Predicated region
      $region86: #{gcn_forward.3} parent=5 // pred_check
        %p678 = pneg %p677
      $region87: #{gcn_forward.3} parent=5 // pred_check_branch
        %680 = sbr.rel (%p678) target = $region89
      $region88: #{gcn_forward.3} parent=5 // pred_region
        %s681 = ssub.s32 %s9, 2
        // Predicated region
        $region90: #{gcn_forward.3} parent=88 // pred_check
          %p682 = pneg %p125
        $region91: #{gcn_forward.3} parent=88 // pred_check_branch
          %684 = sbr.rel (%p682) target = $region93
        $region92: #{gcn_forward.3} parent=88 // pred_region
          %s685 = smul.u32 16, %s20
          %p686 = scmp.lt.s32.totalorder %s685, 31
          %s687 = scalar_select %p686, %s685, 31
          %s688 = smul.addr %s687, 8
          %s689 = scalar_lea.vmem %s3, %s688
        $region93: #{gcn_forward.3} parent=88 // pred_fallthru
          _
      $region89: #{gcn_forward.3} parent=5 // pred_fallthru
        _
    $region6: #{gcn_forward.3} parent=1 // loop_footer
      %s13 = sadd.s32 1, %s9
    $region7: #{gcn_forward.3} parent=1 // loop_footer_branch
      %8 = sbr.rel target = $region3
    $region8: #{gcn_forward.3} parent=1 // loop_exit
      _

// kernel: gcn_forward.2
$region0: #{gcn_forward.2}
  #allocation0 [shape = 'u32[]', space=smem, size = 0x4, offset = 0x4, fixed_abs, tag = 'smem constant byte address 0x4 - core index']
  #allocation1 [shape = 'u32[144,128]{1,0:T(1,128)}', space=vmem, size = 0x12000, scoped, tag = 'internal scratch']
  #allocation2 [shape = 'f32[128,16]{1,0:T(8,128)}', space=vmem, size = 0x10000, scoped, tag = 'scratch operand']
  %s0 = inlined_call_operand.vmem [shape: bf16[256,256], index: 0, kind: input, shape index: {}]
  %s1 = inlined_call_operand.vmem [shape: bf16[256,16], index: 1, kind: input, shape index: {}]
  %s2 = inlined_call_operand.vmem [shape: bf16[16,32], index: 2, kind: input, shape index: {}]
  %s3 = inlined_call_operand.vmem [shape: f32[1,32], index: 3, kind: input, shape index: {}]
  %s4 = inlined_call_operand.vmem [shape: bf16[32,128], index: 4, kind: input, shape index: {}]
  %s5 = inlined_call_operand.vmem [shape: bf16[256,128], index: 5, kind: output, shape index: {}]
  %s6 = sld [smem:[#allocation0]]
  $region102: #{gcn_forward.2} parent=0
    _
  %s8 = ssub.s32 1, %s6
  %s9 = scalar_select 0, %s8, %s6
  $region1: #{gcn_forward.2} parent=0
    #allocation3 [shape = 'u8[65536]{0}', space=vmem, size = 0x10000, scoped, tag = 'input window, operand 0']
    loop: start=0, step=1, limit=6
    $region2: #{gcn_forward.2} parent=1 // loop_pre_header
      _
    $region3: #{gcn_forward.2} parent=1 // loop_header
      %s11 = sphi 0, %s15
      %p12 = scmp.ge.s32.totalorder %s11, 6
      %s18 = sphi 0, %s30
      %s19 = sphi 0, %s26
      %s20 = sphi 0, %s18
      %s21 = sphi 0, %s19
      %s22 = sphi 0, %s20
      %s23 = sphi 0, %s21
      %s35 = sphi 0, %s37
      %s38 = sphi 0, %s35
      %s39 = sphi 0, %s38
      %s55 = sphi 0, %s39
      %s61 = sphi 0, %s63
      %s64 = sphi 0, %s61
      %s65 = sphi 0, %s64
      %s81 = sphi 0, %s65
      %s85 = sphi 0, %s85
      %s87 = sphi 0, %s85
      %s88 = sphi 0, %s87
      %s102 = sphi 0, %s88
      %s106 = sphi 0, %s106
      %s108 = sphi 0, %s106
      %s109 = sphi 0, %s108
      %s123 = sphi 0, %s109
      %s127 = sphi 0, %s127
      %s129 = sphi 0, %s127
      %s130 = sphi 0, %s129
      %s144 = sphi 0, %s130
      %s150 = sphi 0, %s152
      %s153 = sphi 0, %s150
      %s154 = sphi 0, %s153
      %s170 = sphi 0, %s154
    $region4: #{gcn_forward.2} parent=1 // loop_header_branch
      %14 = sbr.rel (%p12) target = $region8
    $region5: #{gcn_forward.2} parent=1 // loop_body
      %s16 = ssub.s32 %s11, 1
      %s17 = ssub.s32 %s11, 2
      %s24 = sadd.s32 1, %s19
      %p25 = scmp.ge.s32.totalorder %s24, 2
      %s26 = scalar_select %p25, 0, %s24
      %s27 = sadd.s32 1, %s18
      %s28 = scalar_select %p25, %s27, %s18
      %p29 = scmp.ge.s32.totalorder %s28, 2
      %s30 = scalar_select %p29, 0, %s28
      %s31 = ssub.s32 %s18, %s30
      %s32 = ssub.s32 %s19, %s26
      %s33 = sor.u32 %s31, %s32
      %p34 = scmp.eq.s32.totalorder %s33, 0
      %s36 = sadd.s32 %s35, 1
      %s37 = scalar_select %p34, %s35, %s36
      %p40 = pneg %p34
      %p41 = scmp.eq.s32.totalorder %s11, 3
      %p42 = por %p40, %p41
      %p43 = scmp.ne.s32.totalorder %s35, %s38
      %p44 = scmp.eq.s32.totalorder %s11, 0
      %p45 = por %p43, %p44
      %p46 = scmp.ne.s32.totalorder %s35, %s38
      %p47 = scmp.eq.s32.totalorder %s16, 3
      %p48 = por %p46, %p47
      %p49 = scmp.ne.s32.totalorder %s38, %s39
      %p50 = scmp.eq.s32.totalorder %s16, 0
      %p51 = por %p49, %p50
      %p52 = scmp.ne.s32.totalorder %s38, %s39
      %p53 = scmp.eq.s32.totalorder %s17, 3
      %p54 = por %p52, %p53
      %p56 = scmp.ne.s32.totalorder %s39, %s55
      %p57 = scmp.eq.s32.totalorder %s17, 0
      %p58 = por %p56, %p57
      %s59 = ssub.s32 %s19, %s26
      %p60 = scmp.eq.s32.totalorder %s59, 0
      %s62 = sadd.s32 %s61, 1
      %s63 = scalar_select %p60, %s61, %s62
      %p66 = pneg %p60
      %p67 = scmp.eq.s32.totalorder %s11, 3
      %p68 = por %p66, %p67
      %p69 = scmp.ne.s32.totalorder %s61, %s64
      %p70 = scmp.eq.s32.totalorder %s11, 0
      %p71 = por %p69, %p70
      %p72 = scmp.ne.s32.totalorder %s61, %s64
      %p73 = scmp.eq.s32.totalorder %s16, 3
      %p74 = por %p72, %p73
      %p75 = scmp.ne.s32.totalorder %s64, %s65
      %p76 = scmp.eq.s32.totalorder %s16, 0
      %p77 = por %p75, %p76
      %p78 = scmp.ne.s32.totalorder %s64, %s65
      %p79 = scmp.eq.s32.totalorder %s17, 3
      %p80 = por %p78, %p79
      %p82 = scmp.ne.s32.totalorder %s65, %s81
      %p83 = scmp.eq.s32.totalorder %s17, 0
      %p84 = por %p82, %p83
      %s86 = sadd.s32 %s85, 1
      %p89 = scmp.eq.s32.totalorder %s11, 3
      %p90 = scmp.ne.s32.totalorder %s85, %s87
      %p91 = scmp.eq.s32.totalorder %s11, 0
      %p92 = por %p90, %p91
      %p93 = scmp.ne.s32.totalorder %s85, %s87
      %p94 = scmp.eq.s32.totalorder %s16, 3
      %p95 = por %p93, %p94
      %p96 = scmp.ne.s32.totalorder %s87, %s88
      %p97 = scmp.eq.s32.totalorder %s16, 0
      %p98 = por %p96, %p97
      %p99 = scmp.ne.s32.totalorder %s87, %s88
      %p100 = scmp.eq.s32.totalorder %s17, 3
      %p101 = por %p99, %p100
      %p103 = scmp.ne.s32.totalorder %s88, %s102
      %p104 = scmp.eq.s32.totalorder %s17, 0
      %p105 = por %p103, %p104
      %s107 = sadd.s32 %s106, 1
      %p110 = scmp.eq.s32.totalorder %s11, 3
      %p111 = scmp.ne.s32.totalorder %s106, %s108
      %p112 = scmp.eq.s32.totalorder %s11, 0
      %p113 = por %p111, %p112
      %p114 = scmp.ne.s32.totalorder %s106, %s108
      %p115 = scmp.eq.s32.totalorder %s16, 3
      %p116 = por %p114, %p115
      %p117 = scmp.ne.s32.totalorder %s108, %s109
      %p118 = scmp.eq.s32.totalorder %s16, 0
      %p119 = por %p117, %p118
      %p120 = scmp.ne.s32.totalorder %s108, %s109
      %p121 = scmp.eq.s32.totalorder %s17, 3
      %p122 = por %p120, %p121
      %p124 = scmp.ne.s32.totalorder %s109, %s123
      %p125 = scmp.eq.s32.totalorder %s17, 0
      %p126 = por %p124, %p125
      %s128 = sadd.s32 %s127, 1
      %p131 = scmp.eq.s32.totalorder %s11, 3
      %p132 = scmp.ne.s32.totalorder %s127, %s129
      %p133 = scmp.eq.s32.totalorder %s11, 0
      %p134 = por %p132, %p133
      %p135 = scmp.ne.s32.totalorder %s127, %s129
      %p136 = scmp.eq.s32.totalorder %s16, 3
      %p137 = por %p135, %p136
      %p138 = scmp.ne.s32.totalorder %s129, %s130
      %p139 = scmp.eq.s32.totalorder %s16, 0
      %p140 = por %p138, %p139
      %p141 = scmp.ne.s32.totalorder %s129, %s130
      %p142 = scmp.eq.s32.totalorder %s17, 3
      %p143 = por %p141, %p142
      %p145 = scmp.ne.s32.totalorder %s130, %s144
      %p146 = scmp.eq.s32.totalorder %s17, 0
      %p147 = por %p145, %p146
      %s148 = ssub.s32 %s18, %s30
      %p149 = scmp.eq.s32.totalorder %s148, 0
      %s151 = sadd.s32 %s150, 1
      %s152 = scalar_select %p149, %s150, %s151
      %p155 = pneg %p149
      %p156 = scmp.eq.s32.totalorder %s11, 3
      %p157 = por %p155, %p156
      %p158 = scmp.ne.s32.totalorder %s150, %s153
      %p159 = scmp.eq.s32.totalorder %s11, 0
      %p160 = por %p158, %p159
      %p161 = scmp.ne.s32.totalorder %s150, %s153
      %p162 = scmp.eq.s32.totalorder %s16, 3
      %p163 = por %p161, %p162
      %p164 = scmp.ne.s32.totalorder %s153, %s154
      %p165 = scmp.eq.s32.totalorder %s16, 0
      %p166 = por %p164, %p165
      %p167 = scmp.ne.s32.totalorder %s153, %s154
      %p168 = scmp.eq.s32.totalorder %s17, 3
      %p169 = por %p167, %p168
      %p171 = scmp.ne.s32.totalorder %s154, %s170
      %p172 = scmp.eq.s32.totalorder %s17, 0
      %p173 = por %p171, %p172
      %p174 = scmp.le.s32.totalorder 1, %s11
      %p175 = scmp.lt.s32.totalorder %s11, 5
      %p176 = pnand %p174, %p175
      %p177 = pneg %p176
      // Predicated region
      $region9: #{gcn_forward.2} parent=5 // pred_check
        _
      $region10: #{gcn_forward.2} parent=5 // pred_check_branch
        %179 = sbr.rel (%p176) target = $region12
      $region11: #{gcn_forward.2} parent=5 // pred_region
        %s180 = ssub.s32 %s11, 1
        // Predicated region
        $region13: #{gcn_forward.2} parent=11 // pred_check
          %p181 = pneg %p98
        $region14: #{gcn_forward.2} parent=11 // pred_check_branch
          %183 = sbr.rel (%p181) target = $region16
        $region15: #{gcn_forward.2} parent=11 // pred_region
          _
        $region16: #{gcn_forward.2} parent=11 // pred_fallthru
          _
        // Predicated region
        $region17: #{gcn_forward.2} parent=11 // pred_check
          %p184 = pneg %p119
        $region18: #{gcn_forward.2} parent=11 // pred_check_branch
          %186 = sbr.rel (%p184) target = $region20
        $region19: #{gcn_forward.2} parent=11 // pred_region
          _
        $region20: #{gcn_forward.2} parent=11 // pred_fallthru
          _
        // Predicated region
        $region21: #{gcn_forward.2} parent=11 // pred_check
          %p187 = pneg %p140
        $region22: #{gcn_forward.2} parent=11 // pred_check_branch
          %189 = sbr.rel (%p187) target = $region24
        $region23: #{gcn_forward.2} parent=11 // pred_region
          _
        $region24: #{gcn_forward.2} parent=11 // pred_fallthru
          _
      $region12: #{gcn_forward.2} parent=5 // pred_fallthru
        _
      %p190 = scmp.lt.s32.totalorder %s11, 4
      // Predicated region
      $region25: #{gcn_forward.2} parent=5 // pred_check
        %p191 = pneg %p190
      $region26: #{gcn_forward.2} parent=5 // pred_check_branch
        %193 = sbr.rel (%p191) target = $region28
      $region27: #{gcn_forward.2} parent=5 // pred_region
        // Predicated region
        $region29: #{gcn_forward.2} parent=27 // pred_check
          %p194 = pneg %p45
        $region30: #{gcn_forward.2} parent=27 // pred_check_branch
          %196 = sbr.rel (%p194) target = $region32
        $region31: #{gcn_forward.2} parent=27 // pred_region
          %s197 = sand.u32 %s35, 1
          %s198 = sand.u32 %s35, 1
          %s199 = smul.addr %s198, 64
          %s200 = scalar_lea.vmem [#allocation3], %s199
          %s201 = smul.u32 16, %s18
          %s202 = smul.addr %s201, 2
          %s203 = sadd.s32 %s19, %s202
          %s204 = smul.addr %s203, 4
          %s205 = scalar_lea.vmem %s0, %s204
          // Predicated region
          $region33: #{gcn_forward.2} parent=31 // pred_check
            _
          $region34: #{gcn_forward.2} parent=31 // pred_check_branch
            %207 = sbr.rel (0) target = $region36
          $region35: #{gcn_forward.2} parent=31 // pred_region
            // Predicated region
            $region37: #{gcn_forward.2} parent=35 // pred_check
              _
            $region38: #{gcn_forward.2} parent=35 // pred_check_branch
              %209 = sbr.rel target = $region40
            $region39: #{gcn_forward.2} parent=35 // pred_region
              // Predicated region
              $region52: #{gcn_forward.2} parent=39 // pred_check
                _
              $region53: #{gcn_forward.2} parent=39 // pred_check_branch
                %255 = sbr.rel (0) target = $region55
              $region54: #{gcn_forward.2} parent=39 // pred_region
                loop: start=0, step=1, limit=1
                $region56: #{gcn_forward.2} parent=54 // loop_pre_header
                  _
                $region57: #{gcn_forward.2} parent=54 // loop_header
                  %s257 = sphi 0, %s261
                  %p258 = scmp.ge.s32.totalorder %s257, 1
                  %s262 = sphi %s205, %s205
                  %s263 = sphi %s200, %s200
                $region58: #{gcn_forward.2} parent=54 // loop_header_branch
                  %260 = sbr.rel (%p258) target = $region62
                $region59: #{gcn_forward.2} parent=54 // loop_body
                  _
                $region60: #{gcn_forward.2} parent=54 // loop_footer
                  %s261 = sadd.s32 1, %s257
                $region61: #{gcn_forward.2} parent=54 // loop_footer_branch
                  %256 = sbr.rel target = $region57
                $region62: #{gcn_forward.2} parent=54 // loop_exit
                  _
                %s265 = ssub.s32 16, 1
                loop: start=0, step=1, limit=1
                $region63: #{gcn_forward.2} parent=54 // loop_pre_header
                  _
                $region64: #{gcn_forward.2} parent=54 // loop_header
                  %s267 = sphi 0, %s271
                  %p268 = scmp.ge.s32.totalorder %s267, 1
                  %s272 = sphi %s205, %s205
                  %s273 = sphi %s200, %s200
                $region65: #{gcn_forward.2} parent=54 // loop_header_branch
                  %270 = sbr.rel (%p268) target = $region69
                $region66: #{gcn_forward.2} parent=54 // loop_body
                  %v274 = vld [vmem:[%s272] sm:%s265]
                  %275 = vst [vmem:[%s273] sm:%s265] %v274
                  %v276 = vld [vmem:[%s272 + $0x8] sm:%s265]
                  %277 = vst [vmem:[%s273 + $0x4] sm:%s265] %v276
                  %v278 = vld [vmem:[%s272 + $0x10] sm:%s265]
                  %279 = vst [vmem:[%s273 + $0x8] sm:%s265] %v278
                  %v280 = vld [vmem:[%s272 + $0x18] sm:%s265]
                  %281 = vst [vmem:[%s273 + $0xc] sm:%s265] %v280
                  %v282 = vld [vmem:[%s272 + $0x20] sm:%s265]
                  %283 = vst [vmem:[%s273 + $0x10] sm:%s265] %v282
                  %v284 = vld [vmem:[%s272 + $0x28] sm:%s265]
                  %285 = vst [vmem:[%s273 + $0x14] sm:%s265] %v284
                  %v286 = vld [vmem:[%s272 + $0x30] sm:%s265]
                  %287 = vst [vmem:[%s273 + $0x18] sm:%s265] %v286
                  %v288 = vld [vmem:[%s272 + $0x38] sm:%s265]
                  %289 = vst [vmem:[%s273 + $0x1c] sm:%s265] %v288
                  %v290 = vld [vmem:[%s272 + $0x40] sm:%s265]
                  %291 = vst [vmem:[%s273 + $0x20] sm:%s265] %v290
                  %v292 = vld [vmem:[%s272 + $0x48] sm:%s265]
                  %293 = vst [vmem:[%s273 + $0x24] sm:%s265] %v292
                  %v294 = vld [vmem:[%s272 + $0x50] sm:%s265]
                  %295 = vst [vmem:[%s273 + $0x28] sm:%s265] %v294
                  %v296 = vld [vmem:[%s272 + $0x58] sm:%s265]
                  %297 = vst [vmem:[%s273 + $0x2c] sm:%s265] %v296
                  %v298 = vld [vmem:[%s272 + $0x60] sm:%s265]
                  %299 = vst [vmem:[%s273 + $0x30] sm:%s265] %v298
                  %v300 = vld [vmem:[%s272 + $0x68] sm:%s265]
                  %301 = vst [vmem:[%s273 + $0x34] sm:%s265] %v300
                  %v302 = vld [vmem:[%s272 + $0x70] sm:%s265]
                  %303 = vst [vmem:[%s273 + $0x38] sm:%s265] %v302
                  %v304 = vld [vmem:[%s272 + $0x78] sm:%s265]
                  %305 = vst [vmem:[%s273 + $0x3c] sm:%s265] %v304
                $region67: #{gcn_forward.2} parent=54 // loop_footer
                  %s271 = sadd.s32 1, %s267
                $region68: #{gcn_forward.2} parent=54 // loop_footer_branch
                  %266 = sbr.rel target = $region64
                $region69: #{gcn_forward.2} parent=54 // loop_exit
                  _
              $region55: #{gcn_forward.2} parent=39 // pred_fallthru
                _
            $region40: #{gcn_forward.2} parent=35 // pred_fallthru
              _
            // Predicated region
            $region41: #{gcn_forward.2} parent=35 // pred_check
              _
            $region42: #{gcn_forward.2} parent=35 // pred_check_branch
              %211 = sbr.rel (0) target = $region44
            $region43: #{gcn_forward.2} parent=35 // pred_region
              %s213 = ssub.s32 16, 1
              loop: start=0, step=1, limit=1
              $region45: #{gcn_forward.2} parent=43 // loop_pre_header
                _
              $region46: #{gcn_forward.2} parent=43 // loop_header
                %s215 = sphi 0, %s219
                %p216 = scmp.ge.s32.totalorder %s215, 1
                %s220 = sphi %s205, %s205
                %s221 = sphi %s200, %s200
              $region47: #{gcn_forward.2} parent=43 // loop_header_branch
                %218 = sbr.rel (%p216) target = $region51
              $region48: #{gcn_forward.2} parent=43 // loop_body
                %v222 = vld [vmem:[%s220] sm:%s213]
                %223 = vst [vmem:[%s221] sm:%s213] %v222
                %v224 = vld [vmem:[%s220 + $0x8] sm:%s213]
                %225 = vst [vmem:[%s221 + $0x4] sm:%s213] %v224
                %v226 = vld [vmem:[%s220 + $0x10] sm:%s213]
                %227 = vst [vmem:[%s221 + $0x8] sm:%s213] %v226
                %v228 = vld [vmem:[%s220 + $0x18] sm:%s213]
                %229 = vst [vmem:[%s221 + $0xc] sm:%s213] %v228
                %v230 = vld [vmem:[%s220 + $0x20] sm:%s213]
                %231 = vst [vmem:[%s221 + $0x10] sm:%s213] %v230
                %v232 = vld [vmem:[%s220 + $0x28] sm:%s213]
                %233 = vst [vmem:[%s221 + $0x14] sm:%s213] %v232
                %v234 = vld [vmem:[%s220 + $0x30] sm:%s213]
                %235 = vst [vmem:[%s221 + $0x18] sm:%s213] %v234
                %v236 = vld [vmem:[%s220 + $0x38] sm:%s213]
                %237 = vst [vmem:[%s221 + $0x1c] sm:%s213] %v236
                %v238 = vld [vmem:[%s220 + $0x40] sm:%s213]
                %239 = vst [vmem:[%s221 + $0x20] sm:%s213] %v238
                %v240 = vld [vmem:[%s220 + $0x48] sm:%s213]
                %241 = vst [vmem:[%s221 + $0x24] sm:%s213] %v240
                %v242 = vld [vmem:[%s220 + $0x50] sm:%s213]
                %243 = vst [vmem:[%s221 + $0x28] sm:%s213] %v242
                %v244 = vld [vmem:[%s220 + $0x58] sm:%s213]
                %245 = vst [vmem:[%s221 + $0x2c] sm:%s213] %v244
                %v246 = vld [vmem:[%s220 + $0x60] sm:%s213]
                %247 = vst [vmem:[%s221 + $0x30] sm:%s213] %v246
                %v248 = vld [vmem:[%s220 + $0x68] sm:%s213]
                %249 = vst [vmem:[%s221 + $0x34] sm:%s213] %v248
                %v250 = vld [vmem:[%s220 + $0x70] sm:%s213]
                %251 = vst [vmem:[%s221 + $0x38] sm:%s213] %v250
                %v252 = vld [vmem:[%s220 + $0x78] sm:%s213]
                %253 = vst [vmem:[%s221 + $0x3c] sm:%s213] %v252
              $region49: #{gcn_forward.2} parent=43 // loop_footer
                %s219 = sadd.s32 1, %s215
              $region50: #{gcn_forward.2} parent=43 // loop_footer_branch
                %214 = sbr.rel target = $region46
              $region51: #{gcn_forward.2} parent=43 // loop_exit
                _
            $region44: #{gcn_forward.2} parent=35 // pred_fallthru
              _
          $region36: #{gcn_forward.2} parent=31 // pred_fallthru
            _
          %306 = vnop
        $region32: #{gcn_forward.2} parent=27 // pred_fallthru
          _
        // Predicated region
        $region70: #{gcn_forward.2} parent=27 // pred_check
          %p307 = pneg %p71
        $region71: #{gcn_forward.2} parent=27 // pred_check_branch
          %309 = sbr.rel (%p307) target = $region73
        $region72: #{gcn_forward.2} parent=27 // pred_region
          %s310 = smul.u32 16, %s19
          %p311 = scmp.lt.s32.totalorder %s310, 31
          %s312 = scalar_select %p311, %s310, 31
          %s313 = smul.addr %s312, 4
          %s314 = scalar_lea.vmem %s1, %s313
          %s315 = smul.u32 16, %s19
        $region73: #{gcn_forward.2} parent=27 // pred_fallthru
          _
      $region28: #{gcn_forward.2} parent=5 // pred_fallthru
        _
      %p316 = scmp.le.s32.totalorder 1, %s11
      %p317 = scmp.lt.s32.totalorder %s11, 5
      %p318 = pnand %p316, %p317
      %p319 = pneg %p318
      // Predicated region
      $region74: #{gcn_forward.2} parent=5 // pred_check
        _
      $region75: #{gcn_forward.2} parent=5 // pred_check_branch
        %321 = sbr.rel (%p318) target = $region77
      $region76: #{gcn_forward.2} parent=5 // pred_region
        %s322 = ssub.s32 %s11, 1
        %s323 = sand.u32 %s38, 1
        %s324 = sand.u32 %s38, 1
        %s325 = smul.addr %s324, 64
        %s326 = scalar_lea.vmem [#allocation3], %s325
        // Predicated region
        $region78: #{gcn_forward.2} parent=76 // pred_check
          %p327 = pneg %p51
        $region79: #{gcn_forward.2} parent=76 // pred_check_branch
          %329 = sbr.rel (%p327) target = $region81
        $region80: #{gcn_forward.2} parent=76 // pred_region
          _
        $region81: #{gcn_forward.2} parent=76 // pred_fallthru
          _
        %s330 = sand.u32 %s38, 1
        %s331 = sand.u32 %s38, 1
        %s332 = smul.addr %s331, 64
        %s333 = scalar_lea.vmem [#allocation3], %s332
        %p334 = pneg %p51
        %p335 = pneg %p48
        %s336 = smul.u32 16, %s21
        %p337 = scmp.lt.s32.totalorder %s336, 31
        %s338 = scalar_select %p337, %s336, 31
        %s339 = smul.addr %s338, 4
        %s340 = scalar_lea.vmem %s1, %s339
        %p341 = pneg %p77
        %p342 = pneg %p74
        %p343 = pneg %p98
        %p344 = pneg %p95
        %p345 = pneg %p119
        %p346 = pneg %p116
        %p347 = pneg %p140
        %p348 = pneg %p137
        %p349 = pneg %p166
        %p350 = pneg %p163
        %s351 = smul.u32 16, %s20
        %p352 = scmp.lt.s32.totalorder %s351, 31
        %s353 = scalar_select %p352, %s351, 31
        %s354 = smul.addr %s353, 4
        %s355 = scalar_lea.vmem %s5, %s354
        %s356 = smul.u32 16, %s20
        %s357 = smul.u32 16, %s21
        %p358 = scmp.lt.s32.totalorder %s357, 31
        %s359 = scalar_select %p358, %s357, 31
        %s360 = smul.addr %s359, 4
        %s361 = scalar_lea.vmem %s1, %s360
        %s362 = smul.u32 16, %s21
        %s363 = smul.u32 16, %s20
        %p364 = scmp.lt.s32.totalorder %s363, 31
        %s365 = scalar_select %p364, %s363, 31
        %s366 = smul.addr %s365, 4
        %s367 = scalar_lea.vmem %s5, %s366
        %s368 = smul.u32 16, %s20
        %p370 = scmp.eq.s32.totalorder %s21, 0
        // Predicated region
        $region82: #{gcn_forward.2} parent=76 // pred_check
          %p371 = pneg %p370
        $region83: #{gcn_forward.2} parent=76 // pred_check_branch
          %373 = sbr.rel (%p371) target = $region85
        $region84: #{gcn_forward.2} parent=76 // pred_region
          %vm374 = vcmask 130048
          %375 = vst.msk [vmem:[#allocation2] sm:$0xff] %vm374, 0.0
          %376 = vst.msk [vmem:[#allocation2 + $0x8] sm:$0xff] %vm374, 0.0
          %377 = vst.msk [vmem:[#allocation2 + $0x10] sm:$0xff] %vm374, 0.0
          %378 = vst.msk [vmem:[#allocation2 + $0x18] sm:$0xff] %vm374, 0.0
          %379 = vst.msk [vmem:[#allocation2 + $0x20] sm:$0xff] %vm374, 0.0
          %380 = vst.msk [vmem:[#allocation2 + $0x28] sm:$0xff] %vm374, 0.0
          %381 = vst.msk [vmem:[#allocation2 + $0x30] sm:$0xff] %vm374, 0.0
          %382 = vst.msk [vmem:[#allocation2 + $0x38] sm:$0xff] %vm374, 0.0
          %383 = vst.msk [vmem:[#allocation2 + $0x40] sm:$0xff] %vm374, 0.0
          %384 = vst.msk [vmem:[#allocation2 + $0x48] sm:$0xff] %vm374, 0.0
          %385 = vst.msk [vmem:[#allocation2 + $0x50] sm:$0xff] %vm374, 0.0
          %386 = vst.msk [vmem:[#allocation2 + $0x58] sm:$0xff] %vm374, 0.0
          %387 = vst.msk [vmem:[#allocation2 + $0x60] sm:$0xff] %vm374, 0.0
          %388 = vst.msk [vmem:[#allocation2 + $0x68] sm:$0xff] %vm374, 0.0
          %389 = vst.msk [vmem:[#allocation2 + $0x70] sm:$0xff] %vm374, 0.0
          %390 = vst.msk [vmem:[#allocation2 + $0x78] sm:$0xff] %vm374, 0.0
        $region85: #{gcn_forward.2} parent=76 // pred_fallthru
          _
        %v391 = vld [vmem:[#allocation2] sm:$0xff]
        %v392 = vld [vmem:[#allocation2 + $0x8] sm:$0xff]
        %v393 = vld [vmem:[#allocation2 + $0x10] sm:$0xff]
        %v394 = vld [vmem:[#allocation2 + $0x18] sm:$0xff]
        %v395 = vld [vmem:[#allocation2 + $0x20] sm:$0xff]
        %v396 = vld [vmem:[#allocation2 + $0x28] sm:$0xff]
        %v397 = vld [vmem:[#allocation2 + $0x30] sm:$0xff]
        %v398 = vld [vmem:[#allocation2 + $0x38] sm:$0xff]
        %v399 = vld [vmem:[#allocation2 + $0x40] sm:$0xff]
        %v400 = vld [vmem:[#allocation2 + $0x48] sm:$0xff]
        %v401 = vld [vmem:[#allocation2 + $0x50] sm:$0xff]
        %v402 = vld [vmem:[#allocation2 + $0x58] sm:$0xff]
        %v403 = vld [vmem:[#allocation2 + $0x60] sm:$0xff]
        %v404 = vld [vmem:[#allocation2 + $0x68] sm:$0xff]
        %v405 = vld [vmem:[#allocation2 + $0x70] sm:$0xff]
        %v406 = vld [vmem:[#allocation2 + $0x78] sm:$0xff]
        %v407 = vld [vmem:[%s326] sm:$0xf]
        %v408 = vld [vmem:[%s326 + $0x4] sm:$0xf]
        %v409 = vld [vmem:[%s326 + $0x8] sm:$0xf]
        %v410 = vld [vmem:[%s326 + $0xc] sm:$0xf]
        %v411 = vld [vmem:[%s326 + $0x10] sm:$0xf]
        %v412 = vld [vmem:[%s326 + $0x14] sm:$0xf]
        %v413 = vld [vmem:[%s326 + $0x18] sm:$0xf]
        %v414 = vld [vmem:[%s326 + $0x1c] sm:$0xf]
        %v415 = vld [vmem:[%s326 + $0x20] sm:$0xf]
        %v416 = vld [vmem:[%s326 + $0x24] sm:$0xf]
        %v417 = vld [vmem:[%s326 + $0x28] sm:$0xf]
        %v418 = vld [vmem:[%s326 + $0x2c] sm:$0xf]
        %v419 = vld [vmem:[%s326 + $0x30] sm:$0xf]
        %v420 = vld [vmem:[%s326 + $0x34] sm:$0xf]
        %v421 = vld [vmem:[%s326 + $0x38] sm:$0xf]
        %v422 = vld [vmem:[%s326 + $0x3c] sm:$0xf]
        %v423 = vld [vmem:[%s361] sm:$0xf]
        %v424 = vld [vmem:[%s361 + $0x4] sm:$0xf]
        %v425 = vld [vmem:[%s361 + $0x8] sm:$0xf]
        %v426 = vld [vmem:[%s361 + $0xc] sm:$0xf]
        %v427 = vld [vmem:[%s361 + $0x10] sm:$0xf]
        %v428 = vld [vmem:[%s361 + $0x14] sm:$0xf]
        %v429 = vld [vmem:[%s361 + $0x18] sm:$0xf]
        %v430 = vld [vmem:[%s361 + $0x1c] sm:$0xf]
        %v431 = vld [vmem:[%s361 + $0x20] sm:$0xf]
        %v432 = vld [vmem:[%s361 + $0x24] sm:$0xf]
        %v433 = vld [vmem:[%s361 + $0x28] sm:$0xf]
        %v434 = vld [vmem:[%s361 + $0x2c] sm:$0xf]
        %v435 = vld [vmem:[%s361 + $0x30] sm:$0xf]
        %v436 = vld [vmem:[%s361 + $0x34] sm:$0xf]
        %v437 = vld [vmem:[%s361 + $0x38] sm:$0xf]
        %v438 = vld [vmem:[%s361 + $0x3c] sm:$0xf]
        %v455 = vunpack.c.l.b16 %v407
        %v456 = vunpack.c.l.b16 %v408
        %v457 = vunpack.c.l.b16 %v409
        %v458 = vunpack.c.l.b16 %v410
        %v459 = vunpack.c.l.b16 %v411
        %v460 = vunpack.c.l.b16 %v412
        %v461 = vunpack.c.l.b16 %v413
        %v462 = vunpack.c.l.b16 %v414
        %v463 = vunpack.c.l.b16 %v415
        %v464 = vunpack.c.l.b16 %v416
        %v465 = vunpack.c.l.b16 %v417
        %v466 = vunpack.c.l.b16 %v418
        %v467 = vunpack.c.l.b16 %v419
        %v468 = vunpack.c.l.b16 %v420
        %v469 = vunpack.c.l.b16 %v421
        %v470 = vunpack.c.l.b16 %v422
        %v471 = vpack.c.b16 %v456, %v455
        %v472 = vpack.c.b16 %v458, %v457
        %v473 = vpack.c.b16 %v460, %v459
        %v474 = vpack.c.b16 %v462, %v461
        %v475 = vpack.c.b16 %v464, %v463
        %v476 = vpack.c.b16 %v466, %v465
        %v477 = vpack.c.b16 %v468, %v467
        %v478 = vpack.c.b16 %v470, %v469
        %v503 = vunpack.c.l.b16 %v423
        %v504 = vunpack.c.l.b16 %v424
        %v505 = vunpack.c.l.b16 %v425
        %v506 = vunpack.c.l.b16 %v426
        %v507 = vunpack.c.l.b16 %v427
        %v508 = vunpack.c.l.b16 %v428
        %v509 = vunpack.c.l.b16 %v429
        %v510 = vunpack.c.l.b16 %v430
        %v511 = vunpack.c.l.b16 %v431
        %v512 = vunpack.c.l.b16 %v432
        %v513 = vunpack.c.l.b16 %v433
        %v514 = vunpack.c.l.b16 %v434
        %v515 = vunpack.c.l.b16 %v435
        %v516 = vunpack.c.l.b16 %v436
        %v517 = vunpack.c.l.b16 %v437
        %v518 = vunpack.c.l.b16 %v438
        %v519 = vpack.c.b16 %v504, %v503
        %v520 = vpack.c.b16 %v506, %v505
        %v521 = vpack.c.b16 %v508, %v507
        %v522 = vpack.c.b16 %v510, %v509
        %v523 = vpack.c.b16 %v512, %v511
        %v524 = vpack.c.b16 %v514, %v513
        %v525 = vpack.c.b16 %v516, %v515
        %v526 = vpack.c.b16 %v518, %v517
        %535 = vmatprep.subr.bf16.mxu0 0
        %536 = vmatpush1.bf16.msra.mxu0 %v526
        %537 = vmatprep.subr.bf16.mxu0 0
        %538 = vmatpush1.bf16.msra.mxu0 %v525
        %539 = vmatprep.subr.bf16.mxu0 0
        %540 = vmatpush1.bf16.msra.mxu0 %v524
        %541 = vmatprep.subr.bf16.mxu0 0
        %542 = vmatpush1.bf16.msra.mxu0 %v523
        %543 = vmatprep.subr.bf16.mxu0 0
        %544 = vmatpush1.bf16.msra.mxu0 %v522
        %545 = vmatprep.subr.bf16.mxu0 0
        %546 = vmatpush1.bf16.msra.mxu0 %v521
        %547 = vmatprep.subr.bf16.mxu0 0
        %548 = vmatpush1.bf16.msra.mxu0 %v520
        %549 = vmatprep.subr.bf16.mxu0 0
        %550 = vmatpush1.bf16.msra.mxu0 %v519
        %551 = vmatprep.subr.bf16.mxu0 0
        %552 = vmatpush2.bf16.msra.mxu0 0
        %553 = vmatprep.subr.bf16.mxu0 0
        %554 = vmatpush2.bf16.msra.mxu0 0
        %555 = vmatprep.subr.bf16.mxu0 0
        %556 = vmatpush2.bf16.msra.mxu0 0
        %557 = vmatprep.subr.bf16.mxu0 0
        %558 = vmatpush2.bf16.msra.mxu0 0
        %559 = vmatprep.subr.bf16.mxu0 0
        %560 = vmatpush2.bf16.msra.mxu0 0
        %561 = vmatprep.subr.bf16.mxu0 0
        %562 = vmatpush2.bf16.msra.mxu0 0
        %563 = vmatprep.subr.bf16.mxu0 0
        %564 = vmatpush2.bf16.msra.mxu0 0
        %565 = vmatprep.subr.bf16.mxu0 0
        %566 = vmatpush2.bf16.msra.mxu0 0
        %567 = vmatprep.mubr.bf16.mxu0 0
        %568 = vmatmul.mubr.bf16.gmra.mxu0 %v471
        %v569 = vpop.f32.mrf.mxu0
        %v570 = vadd.f32 0.0, %v569
        %v571 = vpop.f32.mrf.mxu0
        %v572 = vpop.f32.mrf.mxu0
        %v573 = vadd.f32 0.0, %v572
        %v574 = vpop.f32.mrf.mxu0
        %575 = vmatprep.mubr.bf16.mxu0 0
        %576 = vmatmul.mubr.bf16.gmra.mxu0 %v472
        %v577 = vpop.f32.mrf.mxu0
        %v578 = vadd.f32 0.0, %v577
        %v579 = vpop.f32.mrf.mxu0
        %v580 = vpop.f32.mrf.mxu0
        %v581 = vadd.f32 0.0, %v580
        %v582 = vpop.f32.mrf.mxu0
        %583 = vmatprep.mubr.bf16.mxu0 0
        %584 = vmatmul.mubr.bf16.gmra.mxu0 %v473
        %v585 = vpop.f32.mrf.mxu0
        %v586 = vadd.f32 0.0, %v585
        %v587 = vpop.f32.mrf.mxu0
        %v588 = vpop.f32.mrf.mxu0
        %v589 = vadd.f32 0.0, %v588
        %v590 = vpop.f32.mrf.mxu0
        %591 = vmatprep.mubr.bf16.mxu0 0
        %592 = vmatmul.mubr.bf16.gmra.mxu0 %v474
        %v593 = vpop.f32.mrf.mxu0
        %v594 = vadd.f32 0.0, %v593
        %v595 = vpop.f32.mrf.mxu0
        %v596 = vpop.f32.mrf.mxu0
        %v597 = vadd.f32 0.0, %v596
        %v598 = vpop.f32.mrf.mxu0
        %599 = vmatprep.mubr.bf16.mxu0 0
        %600 = vmatmul.mubr.bf16.gmra.mxu0 %v475
        %v601 = vpop.f32.mrf.mxu0
        %v602 = vadd.f32 0.0, %v601
        %v603 = vpop.f32.mrf.mxu0
        %v604 = vpop.f32.mrf.mxu0
        %v605 = vadd.f32 0.0, %v604
        %v606 = vpop.f32.mrf.mxu0
        %607 = vmatprep.mubr.bf16.mxu0 0
        %608 = vmatmul.mubr.bf16.gmra.mxu0 %v476
        %v609 = vpop.f32.mrf.mxu0
        %v610 = vadd.f32 0.0, %v609
        %v611 = vpop.f32.mrf.mxu0
        %v612 = vpop.f32.mrf.mxu0
        %v613 = vadd.f32 0.0, %v612
        %v614 = vpop.f32.mrf.mxu0
        %615 = vmatprep.mubr.bf16.mxu0 0
        %616 = vmatmul.mubr.bf16.gmra.mxu0 %v477
        %v617 = vpop.f32.mrf.mxu0
        %v618 = vadd.f32 0.0, %v617
        %v619 = vpop.f32.mrf.mxu0
        %v620 = vpop.f32.mrf.mxu0
        %v621 = vadd.f32 0.0, %v620
        %v622 = vpop.f32.mrf.mxu0
        %623 = vmatprep.mubr.bf16.mxu0 0
        %624 = vmatmul.mubr.bf16.gmra.mxu0 %v478
        %v625 = vpop.f32.mrf.mxu0
        %v626 = vadd.f32 0.0, %v625
        %v627 = vpop.f32.mrf.mxu0
        %v628 = vpop.f32.mrf.mxu0
        %v629 = vadd.f32 0.0, %v628
        %v630 = vpop.f32.mrf.mxu0
        %631 = vdwg.mxu0
        %v632 = vadd.f32 %v391, %v570
        %v633 = vadd.f32 %v392, %v573
        %v634 = vadd.f32 %v393, %v578
        %v635 = vadd.f32 %v394, %v581
        %v636 = vadd.f32 %v395, %v586
        %v637 = vadd.f32 %v396, %v589
        %v638 = vadd.f32 %v397, %v594
        %v639 = vadd.f32 %v398, %v597
        %v640 = vadd.f32 %v399, %v602
        %v641 = vadd.f32 %v400, %v605
        %v642 = vadd.f32 %v401, %v610
        %v643 = vadd.f32 %v402, %v613
        %v644 = vadd.f32 %v403, %v618
        %v645 = vadd.f32 %v404, %v621
        %v646 = vadd.f32 %v405, %v626
        %v647 = vadd.f32 %v406, %v629
        %vm648 = vcmask 130048
        %649 = vst.msk [vmem:[#allocation2] sm:$0xff] %vm648, %v632
        %650 = vst.msk [vmem:[#allocation2 + $0x8] sm:$0xff] %vm648, %v633
        %651 = vst.msk [vmem:[#allocation2 + $0x10] sm:$0xff] %vm648, %v634
        %652 = vst.msk [vmem:[#allocation2 + $0x18] sm:$0xff] %vm648, %v635
        %653 = vst.msk [vmem:[#allocation2 + $0x20] sm:$0xff] %vm648, %v636
        %654 = vst.msk [vmem:[#allocation2 + $0x28] sm:$0xff] %vm648, %v637
        %655 = vst.msk [vmem:[#allocation2 + $0x30] sm:$0xff] %vm648, %v638
        %656 = vst.msk [vmem:[#allocation2 + $0x38] sm:$0xff] %vm648, %v639
        %657 = vst.msk [vmem:[#allocation2 + $0x40] sm:$0xff] %vm648, %v640
        %658 = vst.msk [vmem:[#allocation2 + $0x48] sm:$0xff] %vm648, %v641
        %659 = vst.msk [vmem:[#allocation2 + $0x50] sm:$0xff] %vm648, %v642
        %660 = vst.msk [vmem:[#allocation2 + $0x58] sm:$0xff] %vm648, %v643
        %661 = vst.msk [vmem:[#allocation2 + $0x60] sm:$0xff] %vm648, %v644
        %662 = vst.msk [vmem:[#allocation2 + $0x68] sm:$0xff] %vm648, %v645
        %663 = vst.msk [vmem:[#allocation2 + $0x70] sm:$0xff] %vm648, %v646
        %664 = vst.msk [vmem:[#allocation2 + $0x78] sm:$0xff] %vm648, %v647
        %p665 = scmp.eq.s32.totalorder %s21, 1
        // Predicated region
        $region86: #{gcn_forward.2} parent=76 // pred_check
          %p666 = pneg %p665
        $region87: #{gcn_forward.2} parent=76 // pred_check_branch
          %668 = sbr.rel (%p666) target = $region89
        $region88: #{gcn_forward.2} parent=76 // pred_region
          %v669 = vld [vmem:[#allocation2] sm:$0xff]
          %v670 = vld [vmem:[#allocation2 + $0x8] sm:$0xff]
          %v671 = vld [vmem:[#allocation2 + $0x10] sm:$0xff]
          %v672 = vld [vmem:[#allocation2 + $0x18] sm:$0xff]
          %v673 = vld [vmem:[#allocation2 + $0x20] sm:$0xff]
          %v674 = vld [vmem:[#allocation2 + $0x28] sm:$0xff]
          %v675 = vld [vmem:[#allocation2 + $0x30] sm:$0xff]
          %v676 = vld [vmem:[#allocation2 + $0x38] sm:$0xff]
          %v677 = vld [vmem:[#allocation2 + $0x40] sm:$0xff]
          %v678 = vld [vmem:[#allocation2 + $0x48] sm:$0xff]
          %v679 = vld [vmem:[#allocation2 + $0x50] sm:$0xff]
          %v680 = vld [vmem:[#allocation2 + $0x58] sm:$0xff]
          %v681 = vld [vmem:[#allocation2 + $0x60] sm:$0xff]
          %v682 = vld [vmem:[#allocation2 + $0x68] sm:$0xff]
          %v683 = vld [vmem:[#allocation2 + $0x70] sm:$0xff]
          %v684 = vld [vmem:[#allocation2 + $0x78] sm:$0xff]
          %v685 = vpack.c.bf16 %v670, %v669
          %v686 = vpack.c.bf16 %v672, %v671
          %v687 = vpack.c.bf16 %v674, %v673
          %v688 = vpack.c.bf16 %v676, %v675
          %v689 = vpack.c.bf16 %v678, %v677
          %v690 = vpack.c.bf16 %v680, %v679
          %v691 = vpack.c.bf16 %v682, %v681
          %v692 = vpack.c.bf16 %v684, %v683
          %v693 = vld [vmem:[%s2] sm:$0xf]
          %v694 = vld [vmem:[%s2 + $0x4] sm:$0xf]
          %v695 = vld [vmem:[%s3] sm:$0x1]
          %v697 = vlaneseq
          %v698 = vshrl.u32 %v697, 7
          %v699 = vsub.s32 0, %v698
          %v700 = vrot.slane %v695, %v699
          %v704 = vunpack.c.l.b16 %v693
          %v705 = vunpack.c.l.b16 %v694
          %v706 = vpack.c.b16 %v705, %v704
          %v709 = vsel %vm648, %v685, 0
          %v712 = vsel %vm648, %v686, 0
          %v715 = vsel %vm648, %v687, 0
          %v718 = vsel %vm648, %v688, 0
          %v721 = vsel %vm648, %v689, 0
          %v724 = vsel %vm648, %v690, 0
          %v727 = vsel %vm648, %v691, 0
          %v730 = vsel %vm648, %v692, 0
          %732 = vmatprep.subr.bf16.mxu0 0
          %733 = vmatpush1.bf16.msra.mxu0 0
          %734 = vmatprep.subr.bf16.mxu0 0
          %735 = vmatpush1.bf16.msra.mxu0 0
          %736 = vmatprep.subr.bf16.mxu0 0
          %737 = vmatpush1.bf16.msra.mxu0 0
          %738 = vmatprep.subr.bf16.mxu0 0
          %739 = vmatpush1.bf16.msra.mxu0 0
          %740 = vmatprep.subr.bf16.mxu0 0
          %741 = vmatpush1.bf16.msra.mxu0 0
          %742 = vmatprep.subr.bf16.mxu0 0
          %743 = vmatpush1.bf16.msra.mxu0 0
          %744 = vmatprep.subr.bf16.mxu0 0
          %745 = vmatpush1.bf16.msra.mxu0 0
          %746 = vmatprep.subr.bf16.mxu0 0
          %747 = vmatpush1.bf16.msra.mxu0 %v706
          %748 = vmatprep.subr.bf16.mxu0 0
          %749 = vmatpush2.bf16.msra.mxu0 0
          %750 = vmatprep.subr.bf16.mxu0 0
          %751 = vmatpush2.bf16.msra.mxu0 0
          %752 = vmatprep.subr.bf16.mxu0 0
          %753 = vmatpush2.bf16.msra.mxu0 0
          %754 = vmatprep.subr.bf16.mxu0 0
          %755 = vmatpush2.bf16.msra.mxu0 0
          %756 = vmatprep.subr.bf16.mxu0 0
          %757 = vmatpush2.bf16.msra.mxu0 0
          %758 = vmatprep.subr.bf16.mxu0 0
          %759 = vmatpush2.bf16.msra.mxu0 0
          %760 = vmatprep.subr.bf16.mxu0 0
          %761 = vmatpush2.bf16.msra.mxu0 0
          %762 = vmatprep.subr.bf16.mxu0 0
          %763 = vmatpush2.bf16.msra.mxu0 0
          %764 = vmatprep.mubr.bf16.mxu0 0
          %765 = vmatmul.mubr.bf16.gmra.mxu0 %v709
          %v766 = vpop.f32.mrf.mxu0
          %v767 = vadd.f32 %v700, %v766
          %v768 = vpop.f32.mrf.mxu0
          %v769 = vpop.f32.mrf.mxu0
          %v770 = vadd.f32 %v700, %v769
          %v771 = vpop.f32.mrf.mxu0
          %772 = vmatprep.mubr.bf16.mxu0 0
          %773 = vmatmul.mubr.bf16.gmra.mxu0 %v712
          %v774 = vpop.f32.mrf.mxu0
          %v775 = vadd.f32 %v700, %v774
          %v776 = vpop.f32.mrf.mxu0
          %v777 = vpop.f32.mrf.mxu0
          %v778 = vadd.f32 %v700, %v777
          %v779 = vpop.f32.mrf.mxu0
          %780 = vmatprep.mubr.bf16.mxu0 0
          %781 = vmatmul.mubr.bf16.gmra.mxu0 %v715
          %v782 = vpop.f32.mrf.mxu0
          %v783 = vadd.f32 %v700, %v782
          %v784 = vpop.f32.mrf.mxu0
          %v785 = vpop.f32.mrf.mxu0
          %v786 = vadd.f32 %v700, %v785
          %v787 = vpop.f32.mrf.mxu0
          %788 = vmatprep.mubr.bf16.mxu0 0
          %789 = vmatmul.mubr.bf16.gmra.mxu0 %v718
          %v790 = vpop.f32.mrf.mxu0
          %v791 = vadd.f32 %v700, %v790
          %v792 = vpop.f32.mrf.mxu0
          %v793 = vpop.f32.mrf.mxu0
          %v794 = vadd.f32 %v700, %v793
          %v795 = vpop.f32.mrf.mxu0
          %796 = vmatprep.mubr.bf16.mxu0 0
          %797 = vmatmul.mubr.bf16.gmra.mxu0 %v721
          %v798 = vpop.f32.mrf.mxu0
          %v799 = vadd.f32 %v700, %v798
          %v800 = vpop.f32.mrf.mxu0
          %v801 = vpop.f32.mrf.mxu0
          %v802 = vadd.f32 %v700, %v801
          %v803 = vpop.f32.mrf.mxu0
          %804 = vmatprep.mubr.bf16.mxu0 0
          %805 = vmatmul.mubr.bf16.gmra.mxu0 %v724
          %v806 = vpop.f32.mrf.mxu0
          %v807 = vadd.f32 %v700, %v806
          %v808 = vpop.f32.mrf.mxu0
          %v809 = vpop.f32.mrf.mxu0
          %v810 = vadd.f32 %v700, %v809
          %v811 = vpop.f32.mrf.mxu0
          %812 = vmatprep.mubr.bf16.mxu0 0
          %813 = vmatmul.mubr.bf16.gmra.mxu0 %v727
          %v814 = vpop.f32.mrf.mxu0
          %v815 = vadd.f32 %v700, %v814
          %v816 = vpop.f32.mrf.mxu0
          %v817 = vpop.f32.mrf.mxu0
          %v818 = vadd.f32 %v700, %v817
          %v819 = vpop.f32.mrf.mxu0
          %820 = vmatprep.mubr.bf16.mxu0 0
          %821 = vmatmul.mubr.bf16.gmra.mxu0 %v730
          %v822 = vpop.f32.mrf.mxu0
          %v823 = vadd.f32 %v700, %v822
          %v824 = vpop.f32.mrf.mxu0
          %v825 = vpop.f32.mrf.mxu0
          %v826 = vadd.f32 %v700, %v825
          %v827 = vpop.f32.mrf.mxu0
          %828 = vdwg.mxu0
          %v829 = vmax.f32 %v767, 0.0
          %v830 = vmax.f32 %v770, 0.0
          %v831 = vmax.f32 %v775, 0.0
          %v832 = vmax.f32 %v778, 0.0
          %v833 = vmax.f32 %v783, 0.0
          %v834 = vmax.f32 %v786, 0.0
          %v835 = vmax.f32 %v791, 0.0
          %v836 = vmax.f32 %v794, 0.0
          %v837 = vmax.f32 %v799, 0.0
          %v838 = vmax.f32 %v802, 0.0
          %v839 = vmax.f32 %v807, 0.0
          %v840 = vmax.f32 %v810, 0.0
          %v841 = vmax.f32 %v815, 0.0
          %v842 = vmax.f32 %v818, 0.0
          %v843 = vmax.f32 %v823, 0.0
          %v844 = vmax.f32 %v826, 0.0
          %v845 = vpack.c.bf16 %v830, %v829
          %v846 = vpack.c.bf16 %v832, %v831
          %v847 = vpack.c.bf16 %v834, %v833
          %v848 = vpack.c.bf16 %v836, %v835
          %v849 = vpack.c.bf16 %v838, %v837
          %v850 = vpack.c.bf16 %v840, %v839
          %v851 = vpack.c.bf16 %v842, %v841
          %v852 = vpack.c.bf16 %v844, %v843
          %v853 = vld [vmem:[%s4] sm:$0xf]
          %v854 = vld [vmem:[%s4 + $0x4] sm:$0xf]
          %v855 = vld [vmem:[%s4 + $0x8] sm:$0xf]
          %v856 = vld [vmem:[%s4 + $0xc] sm:$0xf]
          %v861 = vunpack.c.l.b16 %v853
          %v862 = vunpack.c.l.b16 %v854
          %v863 = vunpack.c.l.b16 %v855
          %v864 = vunpack.c.l.b16 %v856
          %v865 = vpack.c.b16 %v862, %v861
          %v866 = vpack.c.b16 %v864, %v863
          %vm869 = vcmask 261120
          %v871 = vsel %vm869, %v845, 0
          %v874 = vsel %vm869, %v846, 0
          %v877 = vsel %vm869, %v847, 0
          %v880 = vsel %vm869, %v848, 0
          %v883 = vsel %vm869, %v849, 0
          %v886 = vsel %vm869, %v850, 0
          %v889 = vsel %vm869, %v851, 0
          %v892 = vsel %vm869, %v852, 0
          %894 = vmatprep.subr.bf16.mxu0 0
          %895 = vmatpush1.bf16.msra.mxu0 0
          %896 = vmatprep.subr.bf16.mxu0 0
          %897 = vmatpush1.bf16.msra.mxu0 0
          %898 = vmatprep.subr.bf16.mxu0 0
          %899 = vmatpush1.bf16.msra.mxu0 0
          %900 = vmatprep.subr.bf16.mxu0 0
          %901 = vmatpush1.bf16.msra.mxu0 0
          %902 = vmatprep.subr.bf16.mxu0 0
          %903 = vmatpush1.bf16.msra.mxu0 0
          %904 = vmatprep.subr.bf16.mxu0 0
          %905 = vmatpush1.bf16.msra.mxu0 0
          %906 = vmatprep.subr.bf16.mxu0 0
          %907 = vmatpush1.bf16.msra.mxu0 %v866
          %908 = vmatprep.subr.bf16.mxu0 0
          %909 = vmatpush1.bf16.msra.mxu0 %v865
          %910 = vmatprep.subr.bf16.mxu0 0
          %911 = vmatpush2.bf16.msra.mxu0 0
          %912 = vmatprep.subr.bf16.mxu0 0
          %913 = vmatpush2.bf16.msra.mxu0 0
          %914 = vmatprep.subr.bf16.mxu0 0
          %915 = vmatpush2.bf16.msra.mxu0 0
          %916 = vmatprep.subr.bf16.mxu0 0
          %917 = vmatpush2.bf16.msra.mxu0 0
          %918 = vmatprep.subr.bf16.mxu0 0
          %919 = vmatpush2.bf16.msra.mxu0 0
          %920 = vmatprep.subr.bf16.mxu0 0
          %921 = vmatpush2.bf16.msra.mxu0 0
          %922 = vmatprep.subr.bf16.mxu0 0
          %923 = vmatpush2.bf16.msra.mxu0 0
          %924 = vmatprep.subr.bf16.mxu0 0
          %925 = vmatpush2.bf16.msra.mxu0 0
          %926 = vmatprep.mubr.bf16.mxu0 0
          %927 = vmatmul.mubr.bf16.gmra.mxu0 %v871
          %v928 = vpop.f32.mrf.mxu0
          %v929 = vadd.f32 0.0, %v928
          %v930 = vpop.f32.mrf.mxu0
          %v931 = vpop.f32.mrf.mxu0
          %v932 = vadd.f32 0.0, %v931
          %v933 = vpop.f32.mrf.mxu0
          %934 = vmatprep.mubr.bf16.mxu0 0
          %935 = vmatmul.mubr.bf16.gmra.mxu0 %v874
          %v936 = vpop.f32.mrf.mxu0
          %v937 = vadd.f32 0.0, %v936
          %v938 = vpop.f32.mrf.mxu0
          %v939 = vpop.f32.mrf.mxu0
          %v940 = vadd.f32 0.0, %v939
          %v941 = vpop.f32.mrf.mxu0
          %942 = vmatprep.mubr.bf16.mxu0 0
          %943 = vmatmul.mubr.bf16.gmra.mxu0 %v877
          %v944 = vpop.f32.mrf.mxu0
          %v945 = vadd.f32 0.0, %v944
          %v946 = vpop.f32.mrf.mxu0
          %v947 = vpop.f32.mrf.mxu0
          %v948 = vadd.f32 0.0, %v947
          %v949 = vpop.f32.mrf.mxu0
          %950 = vmatprep.mubr.bf16.mxu0 0
          %951 = vmatmul.mubr.bf16.gmra.mxu0 %v880
          %v952 = vpop.f32.mrf.mxu0
          %v953 = vadd.f32 0.0, %v952
          %v954 = vpop.f32.mrf.mxu0
          %v955 = vpop.f32.mrf.mxu0
          %v956 = vadd.f32 0.0, %v955
          %v957 = vpop.f32.mrf.mxu0
          %958 = vmatprep.mubr.bf16.mxu0 0
          %959 = vmatmul.mubr.bf16.gmra.mxu0 %v883
          %v960 = vpop.f32.mrf.mxu0
          %v961 = vadd.f32 0.0, %v960
          %v962 = vpop.f32.mrf.mxu0
          %v963 = vpop.f32.mrf.mxu0
          %v964 = vadd.f32 0.0, %v963
          %v965 = vpop.f32.mrf.mxu0
          %966 = vmatprep.mubr.bf16.mxu0 0
          %967 = vmatmul.mubr.bf16.gmra.mxu0 %v886
          %v968 = vpop.f32.mrf.mxu0
          %v969 = vadd.f32 0.0, %v968
          %v970 = vpop.f32.mrf.mxu0
          %v971 = vpop.f32.mrf.mxu0
          %v972 = vadd.f32 0.0, %v971
          %v973 = vpop.f32.mrf.mxu0
          %974 = vmatprep.mubr.bf16.mxu0 0
          %975 = vmatmul.mubr.bf16.gmra.mxu0 %v889
          %v976 = vpop.f32.mrf.mxu0
          %v977 = vadd.f32 0.0, %v976
          %v978 = vpop.f32.mrf.mxu0
          %v979 = vpop.f32.mrf.mxu0
          %v980 = vadd.f32 0.0, %v979
          %v981 = vpop.f32.mrf.mxu0
          %982 = vmatprep.mubr.bf16.mxu0 0
          %983 = vmatmul.mubr.bf16.gmra.mxu0 %v892
          %v984 = vpop.f32.mrf.mxu0
          %v985 = vadd.f32 0.0, %v984
          %v986 = vpop.f32.mrf.mxu0
          %v987 = vpop.f32.mrf.mxu0
          %v988 = vadd.f32 0.0, %v987
          %v989 = vpop.f32.mrf.mxu0
          %990 = vdwg.mxu0
          %v991 = vpack.c.bf16 %v932, %v929
          %v992 = vpack.c.bf16 %v940, %v937
          %v993 = vpack.c.bf16 %v948, %v945
          %v994 = vpack.c.bf16 %v956, %v953
          %v995 = vpack.c.bf16 %v964, %v961
          %v996 = vpack.c.bf16 %v972, %v969
          %v997 = vpack.c.bf16 %v980, %v977
          %v998 = vpack.c.bf16 %v988, %v985
          %v1007 = vunpack.c.l.b16 %v991
          %v1008 = vunpack.c.h.b16 %v991
          %v1009 = vunpack.c.l.b16 %v992
          %v1010 = vunpack.c.h.b16 %v992
          %v1011 = vunpack.c.l.b16 %v993
          %v1012 = vunpack.c.h.b16 %v993
          %v1013 = vunpack.c.l.b16 %v994
          %v1014 = vunpack.c.h.b16 %v994
          %v1015 = vunpack.c.l.b16 %v995
          %v1016 = vunpack.c.h.b16 %v995
          %v1017 = vunpack.c.l.b16 %v996
          %v1018 = vunpack.c.h.b16 %v996
          %v1019 = vunpack.c.l.b16 %v997
          %v1020 = vunpack.c.h.b16 %v997
          %v1021 = vunpack.c.l.b16 %v998
          %v1022 = vunpack.c.h.b16 %v998
          %v1023 = vpack.c.b16 %v1007, %v1007
          %v1024 = vpack.c.b16 %v1008, %v1008
          %v1025 = vpack.c.b16 %v1009, %v1009
          %v1026 = vpack.c.b16 %v1010, %v1010
          %v1027 = vpack.c.b16 %v1011, %v1011
          %v1028 = vpack.c.b16 %v1012, %v1012
          %v1029 = vpack.c.b16 %v1013, %v1013
          %v1030 = vpack.c.b16 %v1014, %v1014
          %v1031 = vpack.c.b16 %v1015, %v1015
          %v1032 = vpack.c.b16 %v1016, %v1016
          %v1033 = vpack.c.b16 %v1017, %v1017
          %v1034 = vpack.c.b16 %v1018, %v1018
          %v1035 = vpack.c.b16 %v1019, %v1019
          %v1036 = vpack.c.b16 %v1020, %v1020
          %v1037 = vpack.c.b16 %v1021, %v1021
          %v1038 = vpack.c.b16 %v1022, %v1022
          %1055 = vst [vmem:[%s367] sm:$0xf] %v1023
          %1056 = vst [vmem:[%s367 + $0x4] sm:$0xf] %v1024
          %1057 = vst [vmem:[%s367 + $0x8] sm:$0xf] %v1025
          %1058 = vst [vmem:[%s367 + $0xc] sm:$0xf] %v1026
          %1059 = vst [vmem:[%s367 + $0x10] sm:$0xf] %v1027
          %1060 = vst [vmem:[%s367 + $0x14] sm:$0xf] %v1028
          %1061 = vst [vmem:[%s367 + $0x18] sm:$0xf] %v1029
          %1062 = vst [vmem:[%s367 + $0x1c] sm:$0xf] %v1030
          %1063 = vst [vmem:[%s367 + $0x20] sm:$0xf] %v1031
          %1064 = vst [vmem:[%s367 + $0x24] sm:$0xf] %v1032
          %1065 = vst [vmem:[%s367 + $0x28] sm:$0xf] %v1033
          %1066 = vst [vmem:[%s367 + $0x2c] sm:$0xf] %v1034
          %1067 = vst [vmem:[%s367 + $0x30] sm:$0xf] %v1035
          %1068 = vst [vmem:[%s367 + $0x34] sm:$0xf] %v1036
          %1069 = vst [vmem:[%s367 + $0x38] sm:$0xf] %v1037
          %1070 = vst [vmem:[%s367 + $0x3c] sm:$0xf] %v1038
        $region89: #{gcn_forward.2} parent=76 // pred_fallthru
          _
        %s1071 = smul.u32 16, %s20
        %p1072 = scmp.lt.s32.totalorder %s1071, 31
        %s1073 = scalar_select %p1072, %s1071, 31
        %s1074 = smul.addr %s1073, 4
        %s1075 = scalar_lea.vmem %s5, %s1074
        // Predicated region
        $region90: #{gcn_forward.2} parent=76 // pred_check
          %p1076 = pneg %p163
        $region91: #{gcn_forward.2} parent=76 // pred_check_branch
          %1078 = sbr.rel (%p1076) target = $region93
        $region92: #{gcn_forward.2} parent=76 // pred_region
          %s1079 = smul.u32 16, %s20
        $region93: #{gcn_forward.2} parent=76 // pred_fallthru
          _
      $region77: #{gcn_forward.2} parent=5 // pred_fallthru
        _
      %p1080 = scmp.le.s32.totalorder 2, %s11
      // Predicated region
      $region94: #{gcn_forward.2} parent=5 // pred_check
        %p1081 = pneg %p1080
      $region95: #{gcn_forward.2} parent=5 // pred_check_branch
        %1083 = sbr.rel (%p1081) target = $region97
      $region96: #{gcn_forward.2} parent=5 // pred_region
        %s1084 = ssub.s32 %s11, 2
        // Predicated region
        $region98: #{gcn_forward.2} parent=96 // pred_check
          %p1085 = pneg %p169
        $region99: #{gcn_forward.2} parent=96 // pred_check_branch
          %1087 = sbr.rel (%p1085) target = $region101
        $region100: #{gcn_forward.2} parent=96 // pred_region
          %s1088 = smul.u32 16, %s22
          %p1089 = scmp.lt.s32.totalorder %s1088, 31
          %s1090 = scalar_select %p1089, %s1088, 31
          %s1091 = smul.addr %s1090, 4
          %s1092 = scalar_lea.vmem %s5, %s1091
        $region101: #{gcn_forward.2} parent=96 // pred_fallthru
          _
      $region97: #{gcn_forward.2} parent=5 // pred_fallthru
        _
    $region6: #{gcn_forward.2} parent=1 // loop_footer
      %s15 = sadd.s32 1, %s11
    $region7: #{gcn_forward.2} parent=1 // loop_footer_branch
      %10 = sbr.rel target = $region3
    $region8: #{gcn_forward.2} parent=1 // loop_exit
      _

</llo_original>
